<compile_context>
chip_gen: v6e
topology: v6e:2x2x1
jax: 0.10.0
libtpu: 0.0.40
codegen_flags: <defaults>
</compile_context>

<pallas_src>
import numpy as np
import jax
import jax.numpy as jnp
from jax.experimental import pallas as pl
from jax.experimental.pallas import tpu as pltpu

_SUBLANE = 8
_MAX_PACKED_TILE = 1024     # packed rows per grid step (== pack * that many raw rows)


def _round_up(x, m):
    return (x + m - 1) // m * m


def _cdiv(a, b):
    return -(-a // b)


def _default_pack_factor():
    """Batch rows packed per MXU row via the block-diagonal weight.
    k=2 -> 128x128 weight (fills a v5e/v4 128x128 MXU); k=4 -> 256x256 (v6e/v7x)."""
    try:
        kind = jax.devices()[0].device_kind.lower()
    except Exception:
        return 4
    small_mxu = ("v2", "v3", "v4", "v5 lite", "v5e", "v5lite")
    return 2 if any(t in kind for t in small_mxu) else 4


# --------------------------------------------------------------------------
# Reacher group representations (order-2 group: identity + arm reflection)
# --------------------------------------------------------------------------
def get_reacher_action_group_representations():
    # reflection negates both joint torques
    return [np.eye(2), -np.eye(2)]


def get_reacher_invariants():
    return [np.eye(1), np.eye(1)]


def compute_equivariant_basis(in_reps, out_reps, n_samples=1024, seed=1234,
                              rel_tol=1e-6):
    """Symmetrizer recipe: sample random maps, average over group, SVD."""
    rng = np.random.RandomState(seed)
    r_in = in_reps[0].shape[0]
    r_out = out_reps[0].shape[0]
    w = rng.normal(size=(n_samples, r_out, r_in))
    acc = np.zeros_like(w)
    for rho_in, rho_out in zip(in_reps, out_reps):
        acc += np.einsum("oa,nab,bi->noi", rho_out, w, np.linalg.inv(rho_in))
    w_bar = acc / float(len(in_reps))
    flat = w_bar.reshape(n_samples, r_out * r_in)
    _, s, vt = np.linalg.svd(flat, full_matrices=False)
    keep = s > rel_tol * max(float(s.max()), 1e-30)
    basis = vt[keep]
    return basis.reshape(-1, r_out, r_in).astype(np.float32)


# --------------------------------------------------------------------------
# Deterministic parameter init (mirrors BasisLinear.__init__, bias_init=False)
# --------------------------------------------------------------------------
def init_basis_reacher_layer(key, input_size, output_size, out="equivariant",
                             gain_type="xavier"):
    action_group = get_reacher_action_group_representations()
    if out == "equivariant":
        in_reps, out_reps = action_group, action_group
    elif out == "invariant":
        in_reps, out_reps = action_group, get_reacher_invariants()
    else:
        raise ValueError(out)

    basis = compute_equivariant_basis(in_reps, out_reps)  # (rank, r_out, r_in)
    rank, r_out, r_in = basis.shape
    if rank == 0:
        # TODO(synk): out='invariant' on the sign representation has an empty
        # equivariant basis (layer is identically zero); not exercised here.
        raise NotImplementedError("empty equivariant basis")

    fan_in = input_size * r_in
    fan_out = output_size * r_out
    if gain_type == "xavier":
        gain = float(np.sqrt(6.0 / (fan_in + fan_out)))
    else:  # "he"
        gain = float(np.sqrt(6.0 / fan_in))

    coeffs = jax.random.uniform(key, (output_size, input_size, rank),
                                minval=-gain, maxval=gain, dtype=jnp.float32)
    # bias_init=False -> invariant-bias coefficients start at zero => bias == 0.
    bias = jnp.zeros((1, output_size * r_out), dtype=jnp.float32)
    return {
        "basis": jnp.asarray(basis),
        "coeffs": coeffs,
        "bias": bias,
        "dims": (input_size, output_size, r_in, r_out, rank),
    }


# --------------------------------------------------------------------------
# Pallas kernels
# --------------------------------------------------------------------------
def _weight_build_kernel(coeffs_ref, basis_ref, w_ref):
    # coeffs_ref: (Cout*Cin, rank); basis_ref: (rank, Rout*Rin)
    # w_ref[(co,ci),(ro,ri)] = sum_r coeffs[(co,ci),r] * basis[r,(ro,ri)]
    # rank is tiny and static -> VPU rank-1 accumulation instead of a
    # degenerate K=rank MXU matmul. (Off the hot path; runs once per param set.)
    c = coeffs_ref[...]
    bmat = basis_ref[...]
    rank = c.shape[1]
    acc = c[:, 0:1] * bmat[0:1, :]
    for r in range(1, rank):
        acc = acc + c[:, r:r + 1] * bmat[r:r + 1, :]
    w_ref[...] = acc


def _linear_kernel(x_ref, w_ref, o_ref):
    # x_ref: (tb, k*d_in); w_ref: (k*d_in, k*d_out) block-diagonal; o_ref: (tb, k*d_out).
    o_ref[...] = jnp.dot(x_ref[...], w_ref[...],
                         preferred_element_type=jnp.float32)


def _linear_bias_kernel(x_ref, w_ref, b_ref, o_ref):
    o_ref[...] = (jnp.dot(x_ref[...], w_ref[...],
                          preferred_element_type=jnp.float32)
                  + b_ref[...])


def _build_weight_pairs(coeffs_flat, basis_flat):
    m, r = coeffs_flat.shape
    _, n = basis_flat.shape
    return pl.pallas_call(
        _weight_build_kernel,
        out_shape=jax.ShapeDtypeStruct((m, n), jnp.float32),
        grid=(1,),
        in_specs=[pl.BlockSpec((m, r), lambda i: (0, 0)),
                  pl.BlockSpec((r, n), lambda i: (0, 0))],
        out_specs=pl.BlockSpec((m, n), lambda i: (0, 0)),
        compiler_params=pltpu.CompilerParams(
            dimension_semantics=("arbitrary",)),
    )(coeffs_flat, basis_flat)


# --------------------------------------------------------------------------
# One-time parameter preparation (hoisted out of the per-forward hot path)
# --------------------------------------------------------------------------
def prepare_weights(params, pack=None):
    """Expand the equivariant basis into the dense weight (Pallas kernel), lay
    it out as (d_in, d_out) for x-major matmul, and pack it into a
    block-diagonal (k*d_in, k*d_out) weight so k batch rows ride on one MXU row
    -> exact, lane-dense output with no N-padding and no wrapper column slice.
    Run eagerly (not under jit); re-run after coeffs/bias change."""
    c_in, c_out, r_in, r_out, rank = params["dims"]
    d_in, d_out = c_in * r_in, c_out * r_out
    k = int(pack) if pack is not None else _default_pack_factor()
    k = max(k, 1)

    coeffs_flat = params["coeffs"].reshape(c_out * c_in, rank)
    basis_flat = params["basis"].reshape(rank, r_out * r_in)
    w_pairs = _build_weight_pairs(coeffs_flat, basis_flat)  # (Cout*Cin, Rout*Rin)

    # One-time layout plumbing: (co,ci,ro,ri) -> (ci*Rin, co*Rout).
    wt = (w_pairs.reshape(c_out, c_in, r_out, r_in)
                 .transpose(1, 3, 0, 2)
                 .reshape(d_in, d_out))

    # Block-diagonal packing: packed-input row-block j maps to packed-output
    # column-block j (so out[g*k+j, :] = x[g*k+j, :] @ wt exactly).
    wblk = jnp.zeros((k * d_in, k * d_out), jnp.float32)
    for j in range(k):
        wblk = wblk.at[j * d_in:(j + 1) * d_in,
                       j * d_out:(j + 1) * d_out].set(wt)

    bias_blk = jnp.tile(params["bias"].reshape(1, d_out), (1, k))
    has_bias = bool(np.any(np.asarray(params["bias"]) != 0.0))  # concrete at prep

    new = dict(params)
    new["wblk"] = wblk
    new["bias_blk"] = bias_blk
    new["has_bias"] = has_bias
    new["pack"] = k
    return new


# --------------------------------------------------------------------------
# Forward (mirrors BasisReacherLayer.forward -> BasisLinear.forward)
# --------------------------------------------------------------------------
def basis_reacher_layer_forward(params, state):
    if "wblk" not in params:
        raise ValueError("call prepare_weights(params) before the forward pass")
    c_in, c_out, r_in, r_out, rank = params["dims"]
    d_in, d_out = c_in * r_in, c_out * r_out
    k = params["pack"]
    K, N = k * d_in, k * d_out

    if state.ndim < 2:                    # torch: state.reshape(-1, state.shape[0])
        state = state.reshape(-1, state.shape[0])
    b = state.shape[0]
    if b == 0:                            # empty batch guard (grid=(0,) is invalid)
        return jnp.zeros((0, c_out, r_out), jnp.float32)
    x = state.reshape(b, d_in).astype(jnp.float32)

    # Row packing: pad the batch to a multiple of k (<= k-1 dummy rows, only when
    # ragged) so the (b_k, d_in) -> (b_k/k, k*d_in) reshape is contiguous/free.
    b_k = _round_up(b, k)
    if b_k != b:
        x = jnp.pad(x, ((0, b_k - b), (0, 0)))
    bp = b_k // k
    xp = x.reshape(bp, K)

    # Packed-row tiling: largest sublane-aligned tile, but keep >= 2 grid steps
    # when there is enough work (v7x megacore shards the "parallel" axis) and cap
    # per-step VMEM. The last grid step may overhang bp: safe because each output
    # row depends only on its matching input row and Mosaic clamps boundary DMAs
    # (garbage rows beyond bp are never written back).
    if bp <= _SUBLANE:
        tb = bp                                  # block dim == full array dim: legal
    else:
        tb = min(_MAX_PACKED_TILE, _round_up(_cdiv(bp, 2), _SUBLANE))
    grid = (_cdiv(bp, tb),)

    # Real (unpadded) work for XLA's scheduler.
    flops = 2 * b * d_in * d_out
    bytes_accessed = 4 * (b * d_in + K * N + b * d_out)
    cost = pl.CostEstimate(flops=flops, transcendentals=0,
                           bytes_accessed=bytes_accessed)

    in_specs = [pl.BlockSpec((tb, K), lambda i: (i, 0)),
                pl.BlockSpec((K, N), lambda i: (0, 0))]
    operands = [xp, params["wblk"]]
    kernel = _linear_kernel
    if params["has_bias"]:
        kernel = _linear_bias_kernel
        in_specs.append(pl.BlockSpec((1, N), lambda i: (0, 0)))
        operands.append(params["bias_blk"])

    out_packed = pl.pallas_call(
        kernel,
        out_shape=jax.ShapeDtypeStruct((bp, N), jnp.float32),
        grid=grid,
        in_specs=in_specs,
        out_specs=pl.BlockSpec((tb, N), lambda i: (i, 0)),
        compiler_params=pltpu.CompilerParams(
            dimension_semantics=("parallel",)),
        cost_estimate=cost,
    )(*operands)

    out = out_packed.reshape(b_k, d_out)          # contiguous (free) unpack
    if b_k != b:
        out = out[:b]
    return out.reshape(b, c_out, r_out)


if __name__ == "__main__":
    input_size, output_size, batch = 32, 32, 8
    key = jax.random.PRNGKey(0)
    k_param, k_state = jax.random.split(key)

    params = init_basis_reacher_layer(k_param, input_size, output_size,
                                      out="equivariant", gain_type="xavier")
    params = prepare_weights(params)             # one-time Pallas basis expansion
    c_in, c_out, r_in, r_out, rank = params["dims"]

    # float64 numpy reference of the same forward semantics (ground truth).
    coeffs64 = np.asarray(params["coeffs"], np.float64)
    basis64 = np.asarray(params["basis"], np.float64)
    w_ref = np.einsum("nkr,rmj->nkmj", coeffs64, basis64)   # (co,ci,ro,ri)

    def ref_forward(s):
        x3 = np.asarray(s, np.float64).reshape(s.shape[0], c_in, r_in)
        return np.einsum("bkj,nkmj->bnm", x3, w_ref)

    # Tolerance note: the MXU may run f32 operands as bf16 passes under default
    # precision, so the check allows ~1% error; layout/packing bugs would be O(1).
    RTOL, ATOL = 2e-2, 2e-2

    state = jax.random.normal(k_state, (batch, input_size * r_in),
                              dtype=jnp.float32)

    fwd = jax.jit(lambda s: basis_reacher_layer_forward(params, s))
    out = jax.block_until_ready(fwd(state))
    assert out.shape == (batch, c_out, r_out)
    np.testing.assert_allclose(np.asarray(out), ref_forward(state),
                               rtol=RTOL, atol=ATOL)

    # Equivariance sanity check: reflecting the input reprs negates the output
    # (exact under the same kernel, so tight tolerance).
    out_neg = jax.block_until_ready(fwd(-state))
    np.testing.assert_allclose(np.asarray(out_neg), -np.asarray(out),
                               rtol=1e-6, atol=1e-6)

    # Ragged / larger batches exercise the pack-padding, tiling and overhanging
    # last-block paths.
    for b2 in (10, 300):
        s2 = jax.random.normal(jax.random.PRNGKey(b2),
                               (b2, input_size * r_in), dtype=jnp.float32)
        o2 = jax.block_until_ready(
            jax.jit(lambda s: basis_reacher_layer_forward(params, s))(s2))
        assert o2.shape == (b2, c_out, r_out)
        np.testing.assert_allclose(np.asarray(o2), ref_forward(s2),
                                   rtol=RTOL, atol=ATOL)

    print("KERNEL_OK")
</pallas_src>

<mosaic_0001>
module attributes {stable_mosaic.version = 11 : i64} {
  func.func @_weight_build_kernel(%arg0: i32, %arg1: memref<1024x4xf32, #tpu.memory_space<vmem>>, %arg2: memref<4x4xf32, #tpu.memory_space<vmem>>, %arg3: memref<1024x4xf32, #tpu.memory_space<vmem>>) attributes {dimension_semantics = [#tpu.dimension_semantics<arbitrary>], iteration_bounds = array<i64: 1>, scalar_prefetch = 0 : i64, scratch_operands = 0 : i64, tpu.core_type = #tpu.core_type<tc>, window_params = [{pipeline_mode = #tpu.pipeline_mode<synchronous>, transform_indices = @transform_0, window_bounds = array<i64: 1024, 4>}, {pipeline_mode = #tpu.pipeline_mode<synchronous>, transform_indices = @transform_1, window_bounds = array<i64: 4, 4>}, {pipeline_mode = #tpu.pipeline_mode<synchronous>, transform_indices = @transform_2, window_bounds = array<i64: 1024, 4>}]} {
    %c0 = arith.constant 0 : index
    %c0_0 = arith.constant 0 : index
    %0 = vector.load %arg1[%c0, %c0_0] : memref<1024x4xf32, #tpu.memory_space<vmem>>, vector<1024x4xf32>
    %c0_1 = arith.constant 0 : index
    %c0_2 = arith.constant 0 : index
    %1 = vector.load %arg2[%c0_1, %c0_2] : memref<4x4xf32, #tpu.memory_space<vmem>>, vector<4x4xf32>
    %2 = vector.extract_strided_slice %0 {offsets = [0, 0], sizes = [1024, 1], strides = [1, 1]} : vector<1024x4xf32> to vector<1024x1xf32>
    %3 = vector.extract_strided_slice %1 {offsets = [0, 0], sizes = [1, 4], strides = [1, 1]} : vector<4x4xf32> to vector<1x4xf32>
    %4 = vector.broadcast %2 : vector<1024x1xf32> to vector<1024x4xf32>
    %5 = vector.broadcast %3 : vector<1x4xf32> to vector<1024x4xf32>
    %6 = arith.mulf %4, %5 : vector<1024x4xf32>
    %7 = vector.extract_strided_slice %0 {offsets = [0, 1], sizes = [1024, 1], strides = [1, 1]} : vector<1024x4xf32> to vector<1024x1xf32>
    %8 = vector.extract_strided_slice %1 {offsets = [1, 0], sizes = [1, 4], strides = [1, 1]} : vector<4x4xf32> to vector<1x4xf32>
    %9 = vector.broadcast %7 : vector<1024x1xf32> to vector<1024x4xf32>
    %10 = vector.broadcast %8 : vector<1x4xf32> to vector<1024x4xf32>
    %11 = arith.mulf %9, %10 : vector<1024x4xf32>
    %12 = arith.addf %6, %11 : vector<1024x4xf32>
    %13 = vector.extract_strided_slice %0 {offsets = [0, 2], sizes = [1024, 1], strides = [1, 1]} : vector<1024x4xf32> to vector<1024x1xf32>
    %14 = vector.extract_strided_slice %1 {offsets = [2, 0], sizes = [1, 4], strides = [1, 1]} : vector<4x4xf32> to vector<1x4xf32>
    %15 = vector.broadcast %13 : vector<1024x1xf32> to vector<1024x4xf32>
    %16 = vector.broadcast %14 : vector<1x4xf32> to vector<1024x4xf32>
    %17 = arith.mulf %15, %16 : vector<1024x4xf32>
    %18 = arith.addf %12, %17 : vector<1024x4xf32>
    %19 = vector.extract_strided_slice %0 {offsets = [0, 3], sizes = [1024, 1], strides = [1, 1]} : vector<1024x4xf32> to vector<1024x1xf32>
    %20 = vector.extract_strided_slice %1 {offsets = [3, 0], sizes = [1, 4], strides = [1, 1]} : vector<4x4xf32> to vector<1x4xf32>
    %21 = vector.broadcast %19 : vector<1024x1xf32> to vector<1024x4xf32>
    %22 = vector.broadcast %20 : vector<1x4xf32> to vector<1024x4xf32>
    %23 = arith.mulf %21, %22 : vector<1024x4xf32>
    %24 = arith.addf %18, %23 : vector<1024x4xf32>
    %c0_3 = arith.constant 0 : index
    %c0_4 = arith.constant 0 : index
    %25 = vector.load %arg3[%c0_3, %c0_4] : memref<1024x4xf32, #tpu.memory_space<vmem>>, vector<1024x4xf32>
    tpu.vector_store %arg3[%c0_3, %c0_4], %24 {strides = array<i32>} : memref<1024x4xf32, #tpu.memory_space<vmem>>, vector<1024x4xf32>,
    return
  }
  func.func @transform_0(%arg0: i32) -> (i32, i32) {
    %c0_i32 = arith.constant 0 : i32
    %c0_i32_0 = arith.constant 0 : i32
    %c0_i32_1 = arith.constant 0 : i32
    return %c0_i32, %c0_i32_0 : i32, i32
  }
  func.func @transform_1(%arg0: i32) -> (i32, i32) {
    %c0_i32 = arith.constant 0 : i32
    %c0_i32_0 = arith.constant 0 : i32
    %c0_i32_1 = arith.constant 0 : i32
    return %c0_i32, %c0_i32_0 : i32, i32
  }
  func.func @transform_2(%arg0: i32) -> (i32, i32) {
    %c0_i32 = arith.constant 0 : i32
    %c0_i32_0 = arith.constant 0 : i32
    %c0_i32_1 = arith.constant 0 : i32
    return %c0_i32, %c0_i32_0 : i32, i32
  }
}

</mosaic_0001>

<llo_original>
// kernel: tpu_custom_call.1
$region0: #{tpu_custom_call.1}
  #allocation0 [shape = 'u32[]', space=smem, size = 0x4, offset = 0x4, fixed_abs, tag = 'smem constant byte address 0x4 - core index']
  #allocation1 [shape = 'u32[144,128]{1,0:T(1,128)}', space=vmem, size = 0x12000, scoped, tag = 'internal scratch']
  %s0 = inlined_call_operand.vmem [shape: f32[1024,4], index: 0, kind: input, shape index: {}]
  %s1 = inlined_call_operand.vmem [shape: f32[4,4], index: 1, kind: input, shape index: {}]
  %s2 = inlined_call_operand.vmem [shape: f32[1024,4], index: 2, kind: output, shape index: {}]
  %s3 = sld [smem:[#allocation0]]
  $region18: #{tpu_custom_call.1} parent=0
    _
  %s5 = ssub.s32 1, %s3
  %s6 = scalar_select 0, %s5, %s3
  // Predicated region
  $region2: #{tpu_custom_call.1} parent=0 // pred_check
    _
  $region3: #{tpu_custom_call.1} parent=0 // pred_check_branch
    %8 = sbr.rel (0) target = $region5
  $region4: #{tpu_custom_call.1} parent=0 // pred_region
    _
  $region5: #{tpu_custom_call.1} parent=0 // pred_fallthru
    _
  // Predicated region
  $region6: #{tpu_custom_call.1} parent=0 // pred_check
    _
  $region7: #{tpu_custom_call.1} parent=0 // pred_check_branch
    %10 = sbr.rel (0) target = $region9
  $region8: #{tpu_custom_call.1} parent=0 // pred_region
    _
  $region9: #{tpu_custom_call.1} parent=0 // pred_fallthru
    _
  %v11 = vld [vmem:[%s0] sm:$0xff]
  %v12 = vld [vmem:[%s0 + $0x8] sm:$0xff]
  %v13 = vld [vmem:[%s0 + $0x10] sm:$0xff]
  %v14 = vld [vmem:[%s0 + $0x18] sm:$0xff]
  %v15 = vld [vmem:[%s0 + $0x20] sm:$0xff]
  %v16 = vld [vmem:[%s0 + $0x28] sm:$0xff]
  %v17 = vld [vmem:[%s0 + $0x30] sm:$0xff]
  %v18 = vld [vmem:[%s0 + $0x38] sm:$0xff]
  %v19 = vld [vmem:[%s0 + $0x40] sm:$0xff]
  %v20 = vld [vmem:[%s0 + $0x48] sm:$0xff]
  %v21 = vld [vmem:[%s0 + $0x50] sm:$0xff]
  %v22 = vld [vmem:[%s0 + $0x58] sm:$0xff]
  %v23 = vld [vmem:[%s0 + $0x60] sm:$0xff]
  %v24 = vld [vmem:[%s0 + $0x68] sm:$0xff]
  %v25 = vld [vmem:[%s0 + $0x70] sm:$0xff]
  %v26 = vld [vmem:[%s0 + $0x78] sm:$0xff]
  %v27 = vld [vmem:[%s0 + $0x80] sm:$0xff]
  %v28 = vld [vmem:[%s0 + $0x88] sm:$0xff]
  %v29 = vld [vmem:[%s0 + $0x90] sm:$0xff]
  %v30 = vld [vmem:[%s0 + $0x98] sm:$0xff]
  %v31 = vld [vmem:[%s0 + $0xa0] sm:$0xff]
  %v32 = vld [vmem:[%s0 + $0xa8] sm:$0xff]
  %v33 = vld [vmem:[%s0 + $0xb0] sm:$0xff]
  %v34 = vld [vmem:[%s0 + $0xb8] sm:$0xff]
  %v35 = vld [vmem:[%s0 + $0xc0] sm:$0xff]
  %v36 = vld [vmem:[%s0 + $0xc8] sm:$0xff]
  %v37 = vld [vmem:[%s0 + $0xd0] sm:$0xff]
  %v38 = vld [vmem:[%s0 + $0xd8] sm:$0xff]
  %v39 = vld [vmem:[%s0 + $0xe0] sm:$0xff]
  %v40 = vld [vmem:[%s0 + $0xe8] sm:$0xff]
  %v41 = vld [vmem:[%s0 + $0xf0] sm:$0xff]
  %v42 = vld [vmem:[%s0 + $0xf8] sm:$0xff]
  %v43 = vld [vmem:[%s0 + $0x100] sm:$0xff]
  %v44 = vld [vmem:[%s0 + $0x108] sm:$0xff]
  %v45 = vld [vmem:[%s0 + $0x110] sm:$0xff]
  %v46 = vld [vmem:[%s0 + $0x118] sm:$0xff]
  %v47 = vld [vmem:[%s0 + $0x120] sm:$0xff]
  %v48 = vld [vmem:[%s0 + $0x128] sm:$0xff]
  %v49 = vld [vmem:[%s0 + $0x130] sm:$0xff]
  %v50 = vld [vmem:[%s0 + $0x138] sm:$0xff]
  %v51 = vld [vmem:[%s0 + $0x140] sm:$0xff]
  %v52 = vld [vmem:[%s0 + $0x148] sm:$0xff]
  %v53 = vld [vmem:[%s0 + $0x150] sm:$0xff]
  %v54 = vld [vmem:[%s0 + $0x158] sm:$0xff]
  %v55 = vld [vmem:[%s0 + $0x160] sm:$0xff]
  %v56 = vld [vmem:[%s0 + $0x168] sm:$0xff]
  %v57 = vld [vmem:[%s0 + $0x170] sm:$0xff]
  %v58 = vld [vmem:[%s0 + $0x178] sm:$0xff]
  %v59 = vld [vmem:[%s0 + $0x180] sm:$0xff]
  %v60 = vld [vmem:[%s0 + $0x188] sm:$0xff]
  %v61 = vld [vmem:[%s0 + $0x190] sm:$0xff]
  %v62 = vld [vmem:[%s0 + $0x198] sm:$0xff]
  %v63 = vld [vmem:[%s0 + $0x1a0] sm:$0xff]
  %v64 = vld [vmem:[%s0 + $0x1a8] sm:$0xff]
  %v65 = vld [vmem:[%s0 + $0x1b0] sm:$0xff]
  %v66 = vld [vmem:[%s0 + $0x1b8] sm:$0xff]
  %v67 = vld [vmem:[%s0 + $0x1c0] sm:$0xff]
  %v68 = vld [vmem:[%s0 + $0x1c8] sm:$0xff]
  %v69 = vld [vmem:[%s0 + $0x1d0] sm:$0xff]
  %v70 = vld [vmem:[%s0 + $0x1d8] sm:$0xff]
  %v71 = vld [vmem:[%s0 + $0x1e0] sm:$0xff]
  %v72 = vld [vmem:[%s0 + $0x1e8] sm:$0xff]
  %v73 = vld [vmem:[%s0 + $0x1f0] sm:$0xff]
  %v74 = vld [vmem:[%s0 + $0x1f8] sm:$0xff]
  %v75 = vld [vmem:[%s0 + $0x200] sm:$0xff]
  %v76 = vld [vmem:[%s0 + $0x208] sm:$0xff]
  %v77 = vld [vmem:[%s0 + $0x210] sm:$0xff]
  %v78 = vld [vmem:[%s0 + $0x218] sm:$0xff]
  %v79 = vld [vmem:[%s0 + $0x220] sm:$0xff]
  %v80 = vld [vmem:[%s0 + $0x228] sm:$0xff]
  %v81 = vld [vmem:[%s0 + $0x230] sm:$0xff]
  %v82 = vld [vmem:[%s0 + $0x238] sm:$0xff]
  %v83 = vld [vmem:[%s0 + $0x240] sm:$0xff]
  %v84 = vld [vmem:[%s0 + $0x248] sm:$0xff]
  %v85 = vld [vmem:[%s0 + $0x250] sm:$0xff]
  %v86 = vld [vmem:[%s0 + $0x258] sm:$0xff]
  %v87 = vld [vmem:[%s0 + $0x260] sm:$0xff]
  %v88 = vld [vmem:[%s0 + $0x268] sm:$0xff]
  %v89 = vld [vmem:[%s0 + $0x270] sm:$0xff]
  %v90 = vld [vmem:[%s0 + $0x278] sm:$0xff]
  %v91 = vld [vmem:[%s0 + $0x280] sm:$0xff]
  %v92 = vld [vmem:[%s0 + $0x288] sm:$0xff]
  %v93 = vld [vmem:[%s0 + $0x290] sm:$0xff]
  %v94 = vld [vmem:[%s0 + $0x298] sm:$0xff]
  %v95 = vld [vmem:[%s0 + $0x2a0] sm:$0xff]
  %v96 = vld [vmem:[%s0 + $0x2a8] sm:$0xff]
  %v97 = vld [vmem:[%s0 + $0x2b0] sm:$0xff]
  %v98 = vld [vmem:[%s0 + $0x2b8] sm:$0xff]
  %v99 = vld [vmem:[%s0 + $0x2c0] sm:$0xff]
  %v100 = vld [vmem:[%s0 + $0x2c8] sm:$0xff]
  %v101 = vld [vmem:[%s0 + $0x2d0] sm:$0xff]
  %v102 = vld [vmem:[%s0 + $0x2d8] sm:$0xff]
  %v103 = vld [vmem:[%s0 + $0x2e0] sm:$0xff]
  %v104 = vld [vmem:[%s0 + $0x2e8] sm:$0xff]
  %v105 = vld [vmem:[%s0 + $0x2f0] sm:$0xff]
  %v106 = vld [vmem:[%s0 + $0x2f8] sm:$0xff]
  %v107 = vld [vmem:[%s0 + $0x300] sm:$0xff]
  %v108 = vld [vmem:[%s0 + $0x308] sm:$0xff]
  %v109 = vld [vmem:[%s0 + $0x310] sm:$0xff]
  %v110 = vld [vmem:[%s0 + $0x318] sm:$0xff]
  %v111 = vld [vmem:[%s0 + $0x320] sm:$0xff]
  %v112 = vld [vmem:[%s0 + $0x328] sm:$0xff]
  %v113 = vld [vmem:[%s0 + $0x330] sm:$0xff]
  %v114 = vld [vmem:[%s0 + $0x338] sm:$0xff]
  %v115 = vld [vmem:[%s0 + $0x340] sm:$0xff]
  %v116 = vld [vmem:[%s0 + $0x348] sm:$0xff]
  %v117 = vld [vmem:[%s0 + $0x350] sm:$0xff]
  %v118 = vld [vmem:[%s0 + $0x358] sm:$0xff]
  %v119 = vld [vmem:[%s0 + $0x360] sm:$0xff]
  %v120 = vld [vmem:[%s0 + $0x368] sm:$0xff]
  %v121 = vld [vmem:[%s0 + $0x370] sm:$0xff]
  %v122 = vld [vmem:[%s0 + $0x378] sm:$0xff]
  %v123 = vld [vmem:[%s0 + $0x380] sm:$0xff]
  %v124 = vld [vmem:[%s0 + $0x388] sm:$0xff]
  %v125 = vld [vmem:[%s0 + $0x390] sm:$0xff]
  %v126 = vld [vmem:[%s0 + $0x398] sm:$0xff]
  %v127 = vld [vmem:[%s0 + $0x3a0] sm:$0xff]
  %v128 = vld [vmem:[%s0 + $0x3a8] sm:$0xff]
  %v129 = vld [vmem:[%s0 + $0x3b0] sm:$0xff]
  %v130 = vld [vmem:[%s0 + $0x3b8] sm:$0xff]
  %v131 = vld [vmem:[%s0 + $0x3c0] sm:$0xff]
  %v132 = vld [vmem:[%s0 + $0x3c8] sm:$0xff]
  %v133 = vld [vmem:[%s0 + $0x3d0] sm:$0xff]
  %v134 = vld [vmem:[%s0 + $0x3d8] sm:$0xff]
  %v135 = vld [vmem:[%s0 + $0x3e0] sm:$0xff]
  %v136 = vld [vmem:[%s0 + $0x3e8] sm:$0xff]
  %v137 = vld [vmem:[%s0 + $0x3f0] sm:$0xff]
  %v138 = vld [vmem:[%s0 + $0x3f8] sm:$0xff]
  %v139 = vld [vmem:[%s1] sm:$0xf]
  %141 = vset.pattern.permute.xlu0 0
  %142 = vperm.xlu0 %141, %v11
  %v143 = vpop.permute.xlu0 %142
  %146 = vset.pattern.permute.xlu0 0
  %147 = vperm.xlu0 %146, %v12
  %v148 = vpop.permute.xlu0 %147
  %151 = vset.pattern.permute.xlu0 0
  %152 = vperm.xlu0 %151, %v13
  %v153 = vpop.permute.xlu0 %152
  %156 = vset.pattern.permute.xlu0 0
  %157 = vperm.xlu0 %156, %v14
  %v158 = vpop.permute.xlu0 %157
  %161 = vset.pattern.permute.xlu0 0
  %162 = vperm.xlu0 %161, %v15
  %v163 = vpop.permute.xlu0 %162
  %166 = vset.pattern.permute.xlu0 0
  %167 = vperm.xlu0 %166, %v16
  %v168 = vpop.permute.xlu0 %167
  %171 = vset.pattern.permute.xlu0 0
  %172 = vperm.xlu0 %171, %v17
  %v173 = vpop.permute.xlu0 %172
  %176 = vset.pattern.permute.xlu0 0
  %177 = vperm.xlu0 %176, %v18
  %v178 = vpop.permute.xlu0 %177
  %181 = vset.pattern.permute.xlu0 0
  %182 = vperm.xlu0 %181, %v19
  %v183 = vpop.permute.xlu0 %182
  %186 = vset.pattern.permute.xlu0 0
  %187 = vperm.xlu0 %186, %v20
  %v188 = vpop.permute.xlu0 %187
  %191 = vset.pattern.permute.xlu0 0
  %192 = vperm.xlu0 %191, %v21
  %v193 = vpop.permute.xlu0 %192
  %196 = vset.pattern.permute.xlu0 0
  %197 = vperm.xlu0 %196, %v22
  %v198 = vpop.permute.xlu0 %197
  %201 = vset.pattern.permute.xlu0 0
  %202 = vperm.xlu0 %201, %v23
  %v203 = vpop.permute.xlu0 %202
  %206 = vset.pattern.permute.xlu0 0
  %207 = vperm.xlu0 %206, %v24
  %v208 = vpop.permute.xlu0 %207
  %211 = vset.pattern.permute.xlu0 0
  %212 = vperm.xlu0 %211, %v25
  %v213 = vpop.permute.xlu0 %212
  %216 = vset.pattern.permute.xlu0 0
  %217 = vperm.xlu0 %216, %v26
  %v218 = vpop.permute.xlu0 %217
  %221 = vset.pattern.permute.xlu0 0
  %222 = vperm.xlu0 %221, %v27
  %v223 = vpop.permute.xlu0 %222
  %226 = vset.pattern.permute.xlu0 0
  %227 = vperm.xlu0 %226, %v28
  %v228 = vpop.permute.xlu0 %227
  %231 = vset.pattern.permute.xlu0 0
  %232 = vperm.xlu0 %231, %v29
  %v233 = vpop.permute.xlu0 %232
  %236 = vset.pattern.permute.xlu0 0
  %237 = vperm.xlu0 %236, %v30
  %v238 = vpop.permute.xlu0 %237
  %241 = vset.pattern.permute.xlu0 0
  %242 = vperm.xlu0 %241, %v31
  %v243 = vpop.permute.xlu0 %242
  %246 = vset.pattern.permute.xlu0 0
  %247 = vperm.xlu0 %246, %v32
  %v248 = vpop.permute.xlu0 %247
  %251 = vset.pattern.permute.xlu0 0
  %252 = vperm.xlu0 %251, %v33
  %v253 = vpop.permute.xlu0 %252
  %256 = vset.pattern.permute.xlu0 0
  %257 = vperm.xlu0 %256, %v34
  %v258 = vpop.permute.xlu0 %257
  %261 = vset.pattern.permute.xlu0 0
  %262 = vperm.xlu0 %261, %v35
  %v263 = vpop.permute.xlu0 %262
  %266 = vset.pattern.permute.xlu0 0
  %267 = vperm.xlu0 %266, %v36
  %v268 = vpop.permute.xlu0 %267
  %271 = vset.pattern.permute.xlu0 0
  %272 = vperm.xlu0 %271, %v37
  %v273 = vpop.permute.xlu0 %272
  %276 = vset.pattern.permute.xlu0 0
  %277 = vperm.xlu0 %276, %v38
  %v278 = vpop.permute.xlu0 %277
  %281 = vset.pattern.permute.xlu0 0
  %282 = vperm.xlu0 %281, %v39
  %v283 = vpop.permute.xlu0 %282
  %286 = vset.pattern.permute.xlu0 0
  %287 = vperm.xlu0 %286, %v40
  %v288 = vpop.permute.xlu0 %287
  %291 = vset.pattern.permute.xlu0 0
  %292 = vperm.xlu0 %291, %v41
  %v293 = vpop.permute.xlu0 %292
  %296 = vset.pattern.permute.xlu0 0
  %297 = vperm.xlu0 %296, %v42
  %v298 = vpop.permute.xlu0 %297
  %301 = vset.pattern.permute.xlu0 0
  %302 = vperm.xlu0 %301, %v43
  %v303 = vpop.permute.xlu0 %302
  %306 = vset.pattern.permute.xlu0 0
  %307 = vperm.xlu0 %306, %v44
  %v308 = vpop.permute.xlu0 %307
  %311 = vset.pattern.permute.xlu0 0
  %312 = vperm.xlu0 %311, %v45
  %v313 = vpop.permute.xlu0 %312
  %316 = vset.pattern.permute.xlu0 0
  %317 = vperm.xlu0 %316, %v46
  %v318 = vpop.permute.xlu0 %317
  %321 = vset.pattern.permute.xlu0 0
  %322 = vperm.xlu0 %321, %v47
  %v323 = vpop.permute.xlu0 %322
  %326 = vset.pattern.permute.xlu0 0
  %327 = vperm.xlu0 %326, %v48
  %v328 = vpop.permute.xlu0 %327
  %331 = vset.pattern.permute.xlu0 0
  %332 = vperm.xlu0 %331, %v49
  %v333 = vpop.permute.xlu0 %332
  %336 = vset.pattern.permute.xlu0 0
  %337 = vperm.xlu0 %336, %v50
  %v338 = vpop.permute.xlu0 %337
  %341 = vset.pattern.permute.xlu0 0
  %342 = vperm.xlu0 %341, %v51
  %v343 = vpop.permute.xlu0 %342
  %346 = vset.pattern.permute.xlu0 0
  %347 = vperm.xlu0 %346, %v52
  %v348 = vpop.permute.xlu0 %347
  %351 = vset.pattern.permute.xlu0 0
  %352 = vperm.xlu0 %351, %v53
  %v353 = vpop.permute.xlu0 %352
  %356 = vset.pattern.permute.xlu0 0
  %357 = vperm.xlu0 %356, %v54
  %v358 = vpop.permute.xlu0 %357
  %361 = vset.pattern.permute.xlu0 0
  %362 = vperm.xlu0 %361, %v55
  %v363 = vpop.permute.xlu0 %362
  %366 = vset.pattern.permute.xlu0 0
  %367 = vperm.xlu0 %366, %v56
  %v368 = vpop.permute.xlu0 %367
  %371 = vset.pattern.permute.xlu0 0
  %372 = vperm.xlu0 %371, %v57
  %v373 = vpop.permute.xlu0 %372
  %376 = vset.pattern.permute.xlu0 0
  %377 = vperm.xlu0 %376, %v58
  %v378 = vpop.permute.xlu0 %377
  %381 = vset.pattern.permute.xlu0 0
  %382 = vperm.xlu0 %381, %v59
  %v383 = vpop.permute.xlu0 %382
  %386 = vset.pattern.permute.xlu0 0
  %387 = vperm.xlu0 %386, %v60
  %v388 = vpop.permute.xlu0 %387
  %391 = vset.pattern.permute.xlu0 0
  %392 = vperm.xlu0 %391, %v61
  %v393 = vpop.permute.xlu0 %392
  %396 = vset.pattern.permute.xlu0 0
  %397 = vperm.xlu0 %396, %v62
  %v398 = vpop.permute.xlu0 %397
  %401 = vset.pattern.permute.xlu0 0
  %402 = vperm.xlu0 %401, %v63
  %v403 = vpop.permute.xlu0 %402
  %406 = vset.pattern.permute.xlu0 0
  %407 = vperm.xlu0 %406, %v64
  %v408 = vpop.permute.xlu0 %407
  %411 = vset.pattern.permute.xlu0 0
  %412 = vperm.xlu0 %411, %v65
  %v413 = vpop.permute.xlu0 %412
  %416 = vset.pattern.permute.xlu0 0
  %417 = vperm.xlu0 %416, %v66
  %v418 = vpop.permute.xlu0 %417
  %421 = vset.pattern.permute.xlu0 0
  %422 = vperm.xlu0 %421, %v67
  %v423 = vpop.permute.xlu0 %422
  %426 = vset.pattern.permute.xlu0 0
  %427 = vperm.xlu0 %426, %v68
  %v428 = vpop.permute.xlu0 %427
  %431 = vset.pattern.permute.xlu0 0
  %432 = vperm.xlu0 %431, %v69
  %v433 = vpop.permute.xlu0 %432
  %436 = vset.pattern.permute.xlu0 0
  %437 = vperm.xlu0 %436, %v70
  %v438 = vpop.permute.xlu0 %437
  %441 = vset.pattern.permute.xlu0 0
  %442 = vperm.xlu0 %441, %v71
  %v443 = vpop.permute.xlu0 %442
  %446 = vset.pattern.permute.xlu0 0
  %447 = vperm.xlu0 %446, %v72
  %v448 = vpop.permute.xlu0 %447
  %451 = vset.pattern.permute.xlu0 0
  %452 = vperm.xlu0 %451, %v73
  %v453 = vpop.permute.xlu0 %452
  %456 = vset.pattern.permute.xlu0 0
  %457 = vperm.xlu0 %456, %v74
  %v458 = vpop.permute.xlu0 %457
  %461 = vset.pattern.permute.xlu0 0
  %462 = vperm.xlu0 %461, %v75
  %v463 = vpop.permute.xlu0 %462
  %466 = vset.pattern.permute.xlu0 0
  %467 = vperm.xlu0 %466, %v76
  %v468 = vpop.permute.xlu0 %467
  %471 = vset.pattern.permute.xlu0 0
  %472 = vperm.xlu0 %471, %v77
  %v473 = vpop.permute.xlu0 %472
  %476 = vset.pattern.permute.xlu0 0
  %477 = vperm.xlu0 %476, %v78
  %v478 = vpop.permute.xlu0 %477
  %481 = vset.pattern.permute.xlu0 0
  %482 = vperm.xlu0 %481, %v79
  %v483 = vpop.permute.xlu0 %482
  %486 = vset.pattern.permute.xlu0 0
  %487 = vperm.xlu0 %486, %v80
  %v488 = vpop.permute.xlu0 %487
  %491 = vset.pattern.permute.xlu0 0
  %492 = vperm.xlu0 %491, %v81
  %v493 = vpop.permute.xlu0 %492
  %496 = vset.pattern.permute.xlu0 0
  %497 = vperm.xlu0 %496, %v82
  %v498 = vpop.permute.xlu0 %497
  %501 = vset.pattern.permute.xlu0 0
  %502 = vperm.xlu0 %501, %v83
  %v503 = vpop.permute.xlu0 %502
  %506 = vset.pattern.permute.xlu0 0
  %507 = vperm.xlu0 %506, %v84
  %v508 = vpop.permute.xlu0 %507
  %511 = vset.pattern.permute.xlu0 0
  %512 = vperm.xlu0 %511, %v85
  %v513 = vpop.permute.xlu0 %512
  %516 = vset.pattern.permute.xlu0 0
  %517 = vperm.xlu0 %516, %v86
  %v518 = vpop.permute.xlu0 %517
  %521 = vset.pattern.permute.xlu0 0
  %522 = vperm.xlu0 %521, %v87
  %v523 = vpop.permute.xlu0 %522
  %526 = vset.pattern.permute.xlu0 0
  %527 = vperm.xlu0 %526, %v88
  %v528 = vpop.permute.xlu0 %527
  %531 = vset.pattern.permute.xlu0 0
  %532 = vperm.xlu0 %531, %v89
  %v533 = vpop.permute.xlu0 %532
  %536 = vset.pattern.permute.xlu0 0
  %537 = vperm.xlu0 %536, %v90
  %v538 = vpop.permute.xlu0 %537
  %541 = vset.pattern.permute.xlu0 0
  %542 = vperm.xlu0 %541, %v91
  %v543 = vpop.permute.xlu0 %542
  %546 = vset.pattern.permute.xlu0 0
  %547 = vperm.xlu0 %546, %v92
  %v548 = vpop.permute.xlu0 %547
  %551 = vset.pattern.permute.xlu0 0
  %552 = vperm.xlu0 %551, %v93
  %v553 = vpop.permute.xlu0 %552
  %556 = vset.pattern.permute.xlu0 0
  %557 = vperm.xlu0 %556, %v94
  %v558 = vpop.permute.xlu0 %557
  %561 = vset.pattern.permute.xlu0 0
  %562 = vperm.xlu0 %561, %v95
  %v563 = vpop.permute.xlu0 %562
  %566 = vset.pattern.permute.xlu0 0
  %567 = vperm.xlu0 %566, %v96
  %v568 = vpop.permute.xlu0 %567
  %571 = vset.pattern.permute.xlu0 0
  %572 = vperm.xlu0 %571, %v97
  %v573 = vpop.permute.xlu0 %572
  %576 = vset.pattern.permute.xlu0 0
  %577 = vperm.xlu0 %576, %v98
  %v578 = vpop.permute.xlu0 %577
  %581 = vset.pattern.permute.xlu0 0
  %582 = vperm.xlu0 %581, %v99
  %v583 = vpop.permute.xlu0 %582
  %586 = vset.pattern.permute.xlu0 0
  %587 = vperm.xlu0 %586, %v100
  %v588 = vpop.permute.xlu0 %587
  %591 = vset.pattern.permute.xlu0 0
  %592 = vperm.xlu0 %591, %v101
  %v593 = vpop.permute.xlu0 %592
  %596 = vset.pattern.permute.xlu0 0
  %597 = vperm.xlu0 %596, %v102
  %v598 = vpop.permute.xlu0 %597
  %601 = vset.pattern.permute.xlu0 0
  %602 = vperm.xlu0 %601, %v103
  %v603 = vpop.permute.xlu0 %602
  %606 = vset.pattern.permute.xlu0 0
  %607 = vperm.xlu0 %606, %v104
  %v608 = vpop.permute.xlu0 %607
  %611 = vset.pattern.permute.xlu0 0
  %612 = vperm.xlu0 %611, %v105
  %v613 = vpop.permute.xlu0 %612
  %616 = vset.pattern.permute.xlu0 0
  %617 = vperm.xlu0 %616, %v106
  %v618 = vpop.permute.xlu0 %617
  %621 = vset.pattern.permute.xlu0 0
  %622 = vperm.xlu0 %621, %v107
  %v623 = vpop.permute.xlu0 %622
  %626 = vset.pattern.permute.xlu0 0
  %627 = vperm.xlu0 %626, %v108
  %v628 = vpop.permute.xlu0 %627
  %631 = vset.pattern.permute.xlu0 0
  %632 = vperm.xlu0 %631, %v109
  %v633 = vpop.permute.xlu0 %632
  %636 = vset.pattern.permute.xlu0 0
  %637 = vperm.xlu0 %636, %v110
  %v638 = vpop.permute.xlu0 %637
  %641 = vset.pattern.permute.xlu0 0
  %642 = vperm.xlu0 %641, %v111
  %v643 = vpop.permute.xlu0 %642
  %646 = vset.pattern.permute.xlu0 0
  %647 = vperm.xlu0 %646, %v112
  %v648 = vpop.permute.xlu0 %647
  %651 = vset.pattern.permute.xlu0 0
  %652 = vperm.xlu0 %651, %v113
  %v653 = vpop.permute.xlu0 %652
  %656 = vset.pattern.permute.xlu0 0
  %657 = vperm.xlu0 %656, %v114
  %v658 = vpop.permute.xlu0 %657
  %661 = vset.pattern.permute.xlu0 0
  %662 = vperm.xlu0 %661, %v115
  %v663 = vpop.permute.xlu0 %662
  %666 = vset.pattern.permute.xlu0 0
  %667 = vperm.xlu0 %666, %v116
  %v668 = vpop.permute.xlu0 %667
  %671 = vset.pattern.permute.xlu0 0
  %672 = vperm.xlu0 %671, %v117
  %v673 = vpop.permute.xlu0 %672
  %676 = vset.pattern.permute.xlu0 0
  %677 = vperm.xlu0 %676, %v118
  %v678 = vpop.permute.xlu0 %677
  %681 = vset.pattern.permute.xlu0 0
  %682 = vperm.xlu0 %681, %v119
  %v683 = vpop.permute.xlu0 %682
  %686 = vset.pattern.permute.xlu0 0
  %687 = vperm.xlu0 %686, %v120
  %v688 = vpop.permute.xlu0 %687
  %691 = vset.pattern.permute.xlu0 0
  %692 = vperm.xlu0 %691, %v121
  %v693 = vpop.permute.xlu0 %692
  %696 = vset.pattern.permute.xlu0 0
  %697 = vperm.xlu0 %696, %v122
  %v698 = vpop.permute.xlu0 %697
  %701 = vset.pattern.permute.xlu0 0
  %702 = vperm.xlu0 %701, %v123
  %v703 = vpop.permute.xlu0 %702
  %706 = vset.pattern.permute.xlu0 0
  %707 = vperm.xlu0 %706, %v124
  %v708 = vpop.permute.xlu0 %707
  %711 = vset.pattern.permute.xlu0 0
  %712 = vperm.xlu0 %711, %v125
  %v713 = vpop.permute.xlu0 %712
  %716 = vset.pattern.permute.xlu0 0
  %717 = vperm.xlu0 %716, %v126
  %v718 = vpop.permute.xlu0 %717
  %721 = vset.pattern.permute.xlu0 0
  %722 = vperm.xlu0 %721, %v127
  %v723 = vpop.permute.xlu0 %722
  %726 = vset.pattern.permute.xlu0 0
  %727 = vperm.xlu0 %726, %v128
  %v728 = vpop.permute.xlu0 %727
  %731 = vset.pattern.permute.xlu0 0
  %732 = vperm.xlu0 %731, %v129
  %v733 = vpop.permute.xlu0 %732
  %736 = vset.pattern.permute.xlu0 0
  %737 = vperm.xlu0 %736, %v130
  %v738 = vpop.permute.xlu0 %737
  %741 = vset.pattern.permute.xlu0 0
  %742 = vperm.xlu0 %741, %v131
  %v743 = vpop.permute.xlu0 %742
  %746 = vset.pattern.permute.xlu0 0
  %747 = vperm.xlu0 %746, %v132
  %v748 = vpop.permute.xlu0 %747
  %751 = vset.pattern.permute.xlu0 0
  %752 = vperm.xlu0 %751, %v133
  %v753 = vpop.permute.xlu0 %752
  %756 = vset.pattern.permute.xlu0 0
  %757 = vperm.xlu0 %756, %v134
  %v758 = vpop.permute.xlu0 %757
  %761 = vset.pattern.permute.xlu0 0
  %762 = vperm.xlu0 %761, %v135
  %v763 = vpop.permute.xlu0 %762
  %766 = vset.pattern.permute.xlu0 0
  %767 = vperm.xlu0 %766, %v136
  %v768 = vpop.permute.xlu0 %767
  %771 = vset.pattern.permute.xlu0 0
  %772 = vperm.xlu0 %771, %v137
  %v773 = vpop.permute.xlu0 %772
  %776 = vset.pattern.permute.xlu0 0
  %777 = vperm.xlu0 %776, %v138
  %v778 = vpop.permute.xlu0 %777
  %v780 = vlaneseq
  %v781 = vshrl.u32 %v780, 7
  %v782 = vsub.s32 0, %v781
  %v783 = vrot.slane %v139, %v782
  %v784 = vmul.f32 %v143, %v783
  %v785 = vmul.f32 %v148, %v783
  %v786 = vmul.f32 %v153, %v783
  %v787 = vmul.f32 %v158, %v783
  %v788 = vmul.f32 %v163, %v783
  %v789 = vmul.f32 %v168, %v783
  %v790 = vmul.f32 %v173, %v783
  %v791 = vmul.f32 %v178, %v783
  %v792 = vmul.f32 %v183, %v783
  %v793 = vmul.f32 %v188, %v783
  %v794 = vmul.f32 %v193, %v783
  %v795 = vmul.f32 %v198, %v783
  %v796 = vmul.f32 %v203, %v783
  %v797 = vmul.f32 %v208, %v783
  %v798 = vmul.f32 %v213, %v783
  %v799 = vmul.f32 %v218, %v783
  %v800 = vmul.f32 %v223, %v783
  %v801 = vmul.f32 %v228, %v783
  %v802 = vmul.f32 %v233, %v783
  %v803 = vmul.f32 %v238, %v783
  %v804 = vmul.f32 %v243, %v783
  %v805 = vmul.f32 %v248, %v783
  %v806 = vmul.f32 %v253, %v783
  %v807 = vmul.f32 %v258, %v783
  %v808 = vmul.f32 %v263, %v783
  %v809 = vmul.f32 %v268, %v783
  %v810 = vmul.f32 %v273, %v783
  %v811 = vmul.f32 %v278, %v783
  %v812 = vmul.f32 %v283, %v783
  %v813 = vmul.f32 %v288, %v783
  %v814 = vmul.f32 %v293, %v783
  %v815 = vmul.f32 %v298, %v783
  %v816 = vmul.f32 %v303, %v783
  %v817 = vmul.f32 %v308, %v783
  %v818 = vmul.f32 %v313, %v783
  %v819 = vmul.f32 %v318, %v783
  %v820 = vmul.f32 %v323, %v783
  %v821 = vmul.f32 %v328, %v783
  %v822 = vmul.f32 %v333, %v783
  %v823 = vmul.f32 %v338, %v783
  %v824 = vmul.f32 %v343, %v783
  %v825 = vmul.f32 %v348, %v783
  %v826 = vmul.f32 %v353, %v783
  %v827 = vmul.f32 %v358, %v783
  %v828 = vmul.f32 %v363, %v783
  %v829 = vmul.f32 %v368, %v783
  %v830 = vmul.f32 %v373, %v783
  %v831 = vmul.f32 %v378, %v783
  %v832 = vmul.f32 %v383, %v783
  %v833 = vmul.f32 %v388, %v783
  %v834 = vmul.f32 %v393, %v783
  %v835 = vmul.f32 %v398, %v783
  %v836 = vmul.f32 %v403, %v783
  %v837 = vmul.f32 %v408, %v783
  %v838 = vmul.f32 %v413, %v783
  %v839 = vmul.f32 %v418, %v783
  %v840 = vmul.f32 %v423, %v783
  %v841 = vmul.f32 %v428, %v783
  %v842 = vmul.f32 %v433, %v783
  %v843 = vmul.f32 %v438, %v783
  %v844 = vmul.f32 %v443, %v783
  %v845 = vmul.f32 %v448, %v783
  %v846 = vmul.f32 %v453, %v783
  %v847 = vmul.f32 %v458, %v783
  %v848 = vmul.f32 %v463, %v783
  %v849 = vmul.f32 %v468, %v783
  %v850 = vmul.f32 %v473, %v783
  %v851 = vmul.f32 %v478, %v783
  %v852 = vmul.f32 %v483, %v783
  %v853 = vmul.f32 %v488, %v783
  %v854 = vmul.f32 %v493, %v783
  %v855 = vmul.f32 %v498, %v783
  %v856 = vmul.f32 %v503, %v783
  %v857 = vmul.f32 %v508, %v783
  %v858 = vmul.f32 %v513, %v783
  %v859 = vmul.f32 %v518, %v783
  %v860 = vmul.f32 %v523, %v783
  %v861 = vmul.f32 %v528, %v783
  %v862 = vmul.f32 %v533, %v783
  %v863 = vmul.f32 %v538, %v783
  %v864 = vmul.f32 %v543, %v783
  %v865 = vmul.f32 %v548, %v783
  %v866 = vmul.f32 %v553, %v783
  %v867 = vmul.f32 %v558, %v783
  %v868 = vmul.f32 %v563, %v783
  %v869 = vmul.f32 %v568, %v783
  %v870 = vmul.f32 %v573, %v783
  %v871 = vmul.f32 %v578, %v783
  %v872 = vmul.f32 %v583, %v783
  %v873 = vmul.f32 %v588, %v783
  %v874 = vmul.f32 %v593, %v783
  %v875 = vmul.f32 %v598, %v783
  %v876 = vmul.f32 %v603, %v783
  %v877 = vmul.f32 %v608, %v783
  %v878 = vmul.f32 %v613, %v783
  %v879 = vmul.f32 %v618, %v783
  %v880 = vmul.f32 %v623, %v783
  %v881 = vmul.f32 %v628, %v783
  %v882 = vmul.f32 %v633, %v783
  %v883 = vmul.f32 %v638, %v783
  %v884 = vmul.f32 %v643, %v783
  %v885 = vmul.f32 %v648, %v783
  %v886 = vmul.f32 %v653, %v783
  %v887 = vmul.f32 %v658, %v783
  %v888 = vmul.f32 %v663, %v783
  %v889 = vmul.f32 %v668, %v783
  %v890 = vmul.f32 %v673, %v783
  %v891 = vmul.f32 %v678, %v783
  %v892 = vmul.f32 %v683, %v783
  %v893 = vmul.f32 %v688, %v783
  %v894 = vmul.f32 %v693, %v783
  %v895 = vmul.f32 %v698, %v783
  %v896 = vmul.f32 %v703, %v783
  %v897 = vmul.f32 %v708, %v783
  %v898 = vmul.f32 %v713, %v783
  %v899 = vmul.f32 %v718, %v783
  %v900 = vmul.f32 %v723, %v783
  %v901 = vmul.f32 %v728, %v783
  %v902 = vmul.f32 %v733, %v783
  %v903 = vmul.f32 %v738, %v783
  %v904 = vmul.f32 %v743, %v783
  %v905 = vmul.f32 %v748, %v783
  %v906 = vmul.f32 %v753, %v783
  %v907 = vmul.f32 %v758, %v783
  %v908 = vmul.f32 %v763, %v783
  %v909 = vmul.f32 %v768, %v783
  %v910 = vmul.f32 %v773, %v783
  %v911 = vmul.f32 %v778, %v783
  %912 = vset.pattern.permute.xlu0 1
  %913 = vperm.xlu0 %912, %v11
  %v914 = vpop.permute.xlu0 %913
  %916 = vset.pattern.permute.xlu0 1
  %917 = vperm.xlu0 %916, %v12
  %v918 = vpop.permute.xlu0 %917
  %920 = vset.pattern.permute.xlu0 1
  %921 = vperm.xlu0 %920, %v13
  %v922 = vpop.permute.xlu0 %921
  %924 = vset.pattern.permute.xlu0 1
  %925 = vperm.xlu0 %924, %v14
  %v926 = vpop.permute.xlu0 %925
  %928 = vset.pattern.permute.xlu0 1
  %929 = vperm.xlu0 %928, %v15
  %v930 = vpop.permute.xlu0 %929
  %932 = vset.pattern.permute.xlu0 1
  %933 = vperm.xlu0 %932, %v16
  %v934 = vpop.permute.xlu0 %933
  %936 = vset.pattern.permute.xlu0 1
  %937 = vperm.xlu0 %936, %v17
  %v938 = vpop.permute.xlu0 %937
  %940 = vset.pattern.permute.xlu0 1
  %941 = vperm.xlu0 %940, %v18
  %v942 = vpop.permute.xlu0 %941
  %944 = vset.pattern.permute.xlu0 1
  %945 = vperm.xlu0 %944, %v19
  %v946 = vpop.permute.xlu0 %945
  %948 = vset.pattern.permute.xlu0 1
  %949 = vperm.xlu0 %948, %v20
  %v950 = vpop.permute.xlu0 %949
  %952 = vset.pattern.permute.xlu0 1
  %953 = vperm.xlu0 %952, %v21
  %v954 = vpop.permute.xlu0 %953
  %956 = vset.pattern.permute.xlu0 1
  %957 = vperm.xlu0 %956, %v22
  %v958 = vpop.permute.xlu0 %957
  %960 = vset.pattern.permute.xlu0 1
  %961 = vperm.xlu0 %960, %v23
  %v962 = vpop.permute.xlu0 %961
  %964 = vset.pattern.permute.xlu0 1
  %965 = vperm.xlu0 %964, %v24
  %v966 = vpop.permute.xlu0 %965
  %968 = vset.pattern.permute.xlu0 1
  %969 = vperm.xlu0 %968, %v25
  %v970 = vpop.permute.xlu0 %969
  %972 = vset.pattern.permute.xlu0 1
  %973 = vperm.xlu0 %972, %v26
  %v974 = vpop.permute.xlu0 %973
  %976 = vset.pattern.permute.xlu0 1
  %977 = vperm.xlu0 %976, %v27
  %v978 = vpop.permute.xlu0 %977
  %980 = vset.pattern.permute.xlu0 1
  %981 = vperm.xlu0 %980, %v28
  %v982 = vpop.permute.xlu0 %981
  %984 = vset.pattern.permute.xlu0 1
  %985 = vperm.xlu0 %984, %v29
  %v986 = vpop.permute.xlu0 %985
  %988 = vset.pattern.permute.xlu0 1
  %989 = vperm.xlu0 %988, %v30
  %v990 = vpop.permute.xlu0 %989
  %992 = vset.pattern.permute.xlu0 1
  %993 = vperm.xlu0 %992, %v31
  %v994 = vpop.permute.xlu0 %993
  %996 = vset.pattern.permute.xlu0 1
  %997 = vperm.xlu0 %996, %v32
  %v998 = vpop.permute.xlu0 %997
  %1000 = vset.pattern.permute.xlu0 1
  %1001 = vperm.xlu0 %1000, %v33
  %v1002 = vpop.permute.xlu0 %1001
  %1004 = vset.pattern.permute.xlu0 1
  %1005 = vperm.xlu0 %1004, %v34
  %v1006 = vpop.permute.xlu0 %1005
  %1008 = vset.pattern.permute.xlu0 1
  %1009 = vperm.xlu0 %1008, %v35
  %v1010 = vpop.permute.xlu0 %1009
  %1012 = vset.pattern.permute.xlu0 1
  %1013 = vperm.xlu0 %1012, %v36
  %v1014 = vpop.permute.xlu0 %1013
  %1016 = vset.pattern.permute.xlu0 1
  %1017 = vperm.xlu0 %1016, %v37
  %v1018 = vpop.permute.xlu0 %1017
  %1020 = vset.pattern.permute.xlu0 1
  %1021 = vperm.xlu0 %1020, %v38
  %v1022 = vpop.permute.xlu0 %1021
  %1024 = vset.pattern.permute.xlu0 1
  %1025 = vperm.xlu0 %1024, %v39
  %v1026 = vpop.permute.xlu0 %1025
  %1028 = vset.pattern.permute.xlu0 1
  %1029 = vperm.xlu0 %1028, %v40
  %v1030 = vpop.permute.xlu0 %1029
  %1032 = vset.pattern.permute.xlu0 1
  %1033 = vperm.xlu0 %1032, %v41
  %v1034 = vpop.permute.xlu0 %1033
  %1036 = vset.pattern.permute.xlu0 1
  %1037 = vperm.xlu0 %1036, %v42
  %v1038 = vpop.permute.xlu0 %1037
  %1040 = vset.pattern.permute.xlu0 1
  %1041 = vperm.xlu0 %1040, %v43
  %v1042 = vpop.permute.xlu0 %1041
  %1044 = vset.pattern.permute.xlu0 1
  %1045 = vperm.xlu0 %1044, %v44
  %v1046 = vpop.permute.xlu0 %1045
  %1048 = vset.pattern.permute.xlu0 1
  %1049 = vperm.xlu0 %1048, %v45
  %v1050 = vpop.permute.xlu0 %1049
  %1052 = vset.pattern.permute.xlu0 1
  %1053 = vperm.xlu0 %1052, %v46
  %v1054 = vpop.permute.xlu0 %1053
  %1056 = vset.pattern.permute.xlu0 1
  %1057 = vperm.xlu0 %1056, %v47
  %v1058 = vpop.permute.xlu0 %1057
  %1060 = vset.pattern.permute.xlu0 1
  %1061 = vperm.xlu0 %1060, %v48
  %v1062 = vpop.permute.xlu0 %1061
  %1064 = vset.pattern.permute.xlu0 1
  %1065 = vperm.xlu0 %1064, %v49
  %v1066 = vpop.permute.xlu0 %1065
  %1068 = vset.pattern.permute.xlu0 1
  %1069 = vperm.xlu0 %1068, %v50
  %v1070 = vpop.permute.xlu0 %1069
  %1072 = vset.pattern.permute.xlu0 1
  %1073 = vperm.xlu0 %1072, %v51
  %v1074 = vpop.permute.xlu0 %1073
  %1076 = vset.pattern.permute.xlu0 1
  %1077 = vperm.xlu0 %1076, %v52
  %v1078 = vpop.permute.xlu0 %1077
  %1080 = vset.pattern.permute.xlu0 1
  %1081 = vperm.xlu0 %1080, %v53
  %v1082 = vpop.permute.xlu0 %1081
  %1084 = vset.pattern.permute.xlu0 1
  %1085 = vperm.xlu0 %1084, %v54
  %v1086 = vpop.permute.xlu0 %1085
  %1088 = vset.pattern.permute.xlu0 1
  %1089 = vperm.xlu0 %1088, %v55
  %v1090 = vpop.permute.xlu0 %1089
  %1092 = vset.pattern.permute.xlu0 1
  %1093 = vperm.xlu0 %1092, %v56
  %v1094 = vpop.permute.xlu0 %1093
  %1096 = vset.pattern.permute.xlu0 1
  %1097 = vperm.xlu0 %1096, %v57
  %v1098 = vpop.permute.xlu0 %1097
  %1100 = vset.pattern.permute.xlu0 1
  %1101 = vperm.xlu0 %1100, %v58
  %v1102 = vpop.permute.xlu0 %1101
  %1104 = vset.pattern.permute.xlu0 1
  %1105 = vperm.xlu0 %1104, %v59
  %v1106 = vpop.permute.xlu0 %1105
  %1108 = vset.pattern.permute.xlu0 1
  %1109 = vperm.xlu0 %1108, %v60
  %v1110 = vpop.permute.xlu0 %1109
  %1112 = vset.pattern.permute.xlu0 1
  %1113 = vperm.xlu0 %1112, %v61
  %v1114 = vpop.permute.xlu0 %1113
  %1116 = vset.pattern.permute.xlu0 1
  %1117 = vperm.xlu0 %1116, %v62
  %v1118 = vpop.permute.xlu0 %1117
  %1120 = vset.pattern.permute.xlu0 1
  %1121 = vperm.xlu0 %1120, %v63
  %v1122 = vpop.permute.xlu0 %1121
  %1124 = vset.pattern.permute.xlu0 1
  %1125 = vperm.xlu0 %1124, %v64
  %v1126 = vpop.permute.xlu0 %1125
  %1128 = vset.pattern.permute.xlu0 1
  %1129 = vperm.xlu0 %1128, %v65
  %v1130 = vpop.permute.xlu0 %1129
  %1132 = vset.pattern.permute.xlu0 1
  %1133 = vperm.xlu0 %1132, %v66
  %v1134 = vpop.permute.xlu0 %1133
  %1136 = vset.pattern.permute.xlu0 1
  %1137 = vperm.xlu0 %1136, %v67
  %v1138 = vpop.permute.xlu0 %1137
  %1140 = vset.pattern.permute.xlu0 1
  %1141 = vperm.xlu0 %1140, %v68
  %v1142 = vpop.permute.xlu0 %1141
  %1144 = vset.pattern.permute.xlu0 1
  %1145 = vperm.xlu0 %1144, %v69
  %v1146 = vpop.permute.xlu0 %1145
  %1148 = vset.pattern.permute.xlu0 1
  %1149 = vperm.xlu0 %1148, %v70
  %v1150 = vpop.permute.xlu0 %1149
  %1152 = vset.pattern.permute.xlu0 1
  %1153 = vperm.xlu0 %1152, %v71
  %v1154 = vpop.permute.xlu0 %1153
  %1156 = vset.pattern.permute.xlu0 1
  %1157 = vperm.xlu0 %1156, %v72
  %v1158 = vpop.permute.xlu0 %1157
  %1160 = vset.pattern.permute.xlu0 1
  %1161 = vperm.xlu0 %1160, %v73
  %v1162 = vpop.permute.xlu0 %1161
  %1164 = vset.pattern.permute.xlu0 1
  %1165 = vperm.xlu0 %1164, %v74
  %v1166 = vpop.permute.xlu0 %1165
  %1168 = vset.pattern.permute.xlu0 1
  %1169 = vperm.xlu0 %1168, %v75
  %v1170 = vpop.permute.xlu0 %1169
  %1172 = vset.pattern.permute.xlu0 1
  %1173 = vperm.xlu0 %1172, %v76
  %v1174 = vpop.permute.xlu0 %1173
  %1176 = vset.pattern.permute.xlu0 1
  %1177 = vperm.xlu0 %1176, %v77
  %v1178 = vpop.permute.xlu0 %1177
  %1180 = vset.pattern.permute.xlu0 1
  %1181 = vperm.xlu0 %1180, %v78
  %v1182 = vpop.permute.xlu0 %1181
  %1184 = vset.pattern.permute.xlu0 1
  %1185 = vperm.xlu0 %1184, %v79
  %v1186 = vpop.permute.xlu0 %1185
  %1188 = vset.pattern.permute.xlu0 1
  %1189 = vperm.xlu0 %1188, %v80
  %v1190 = vpop.permute.xlu0 %1189
  %1192 = vset.pattern.permute.xlu0 1
  %1193 = vperm.xlu0 %1192, %v81
  %v1194 = vpop.permute.xlu0 %1193
  %1196 = vset.pattern.permute.xlu0 1
  %1197 = vperm.xlu0 %1196, %v82
  %v1198 = vpop.permute.xlu0 %1197
  %1200 = vset.pattern.permute.xlu0 1
  %1201 = vperm.xlu0 %1200, %v83
  %v1202 = vpop.permute.xlu0 %1201
  %1204 = vset.pattern.permute.xlu0 1
  %1205 = vperm.xlu0 %1204, %v84
  %v1206 = vpop.permute.xlu0 %1205
  %1208 = vset.pattern.permute.xlu0 1
  %1209 = vperm.xlu0 %1208, %v85
  %v1210 = vpop.permute.xlu0 %1209
  %1212 = vset.pattern.permute.xlu0 1
  %1213 = vperm.xlu0 %1212, %v86
  %v1214 = vpop.permute.xlu0 %1213
  %1216 = vset.pattern.permute.xlu0 1
  %1217 = vperm.xlu0 %1216, %v87
  %v1218 = vpop.permute.xlu0 %1217
  %1220 = vset.pattern.permute.xlu0 1
  %1221 = vperm.xlu0 %1220, %v88
  %v1222 = vpop.permute.xlu0 %1221
  %1224 = vset.pattern.permute.xlu0 1
  %1225 = vperm.xlu0 %1224, %v89
  %v1226 = vpop.permute.xlu0 %1225
  %1228 = vset.pattern.permute.xlu0 1
  %1229 = vperm.xlu0 %1228, %v90
  %v1230 = vpop.permute.xlu0 %1229
  %1232 = vset.pattern.permute.xlu0 1
  %1233 = vperm.xlu0 %1232, %v91
  %v1234 = vpop.permute.xlu0 %1233
  %1236 = vset.pattern.permute.xlu0 1
  %1237 = vperm.xlu0 %1236, %v92
  %v1238 = vpop.permute.xlu0 %1237
  %1240 = vset.pattern.permute.xlu0 1
  %1241 = vperm.xlu0 %1240, %v93
  %v1242 = vpop.permute.xlu0 %1241
  %1244 = vset.pattern.permute.xlu0 1
  %1245 = vperm.xlu0 %1244, %v94
  %v1246 = vpop.permute.xlu0 %1245
  %1248 = vset.pattern.permute.xlu0 1
  %1249 = vperm.xlu0 %1248, %v95
  %v1250 = vpop.permute.xlu0 %1249
  %1252 = vset.pattern.permute.xlu0 1
  %1253 = vperm.xlu0 %1252, %v96
  %v1254 = vpop.permute.xlu0 %1253
  %1256 = vset.pattern.permute.xlu0 1
  %1257 = vperm.xlu0 %1256, %v97
  %v1258 = vpop.permute.xlu0 %1257
  %1260 = vset.pattern.permute.xlu0 1
  %1261 = vperm.xlu0 %1260, %v98
  %v1262 = vpop.permute.xlu0 %1261
  %1264 = vset.pattern.permute.xlu0 1
  %1265 = vperm.xlu0 %1264, %v99
  %v1266 = vpop.permute.xlu0 %1265
  %1268 = vset.pattern.permute.xlu0 1
  %1269 = vperm.xlu0 %1268, %v100
  %v1270 = vpop.permute.xlu0 %1269
  %1272 = vset.pattern.permute.xlu0 1
  %1273 = vperm.xlu0 %1272, %v101
  %v1274 = vpop.permute.xlu0 %1273
  %1276 = vset.pattern.permute.xlu0 1
  %1277 = vperm.xlu0 %1276, %v102
  %v1278 = vpop.permute.xlu0 %1277
  %1280 = vset.pattern.permute.xlu0 1
  %1281 = vperm.xlu0 %1280, %v103
  %v1282 = vpop.permute.xlu0 %1281
  %1284 = vset.pattern.permute.xlu0 1
  %1285 = vperm.xlu0 %1284, %v104
  %v1286 = vpop.permute.xlu0 %1285
  %1288 = vset.pattern.permute.xlu0 1
  %1289 = vperm.xlu0 %1288, %v105
  %v1290 = vpop.permute.xlu0 %1289
  %1292 = vset.pattern.permute.xlu0 1
  %1293 = vperm.xlu0 %1292, %v106
  %v1294 = vpop.permute.xlu0 %1293
  %1296 = vset.pattern.permute.xlu0 1
  %1297 = vperm.xlu0 %1296, %v107
  %v1298 = vpop.permute.xlu0 %1297
  %1300 = vset.pattern.permute.xlu0 1
  %1301 = vperm.xlu0 %1300, %v108
  %v1302 = vpop.permute.xlu0 %1301
  %1304 = vset.pattern.permute.xlu0 1
  %1305 = vperm.xlu0 %1304, %v109
  %v1306 = vpop.permute.xlu0 %1305
  %1308 = vset.pattern.permute.xlu0 1
  %1309 = vperm.xlu0 %1308, %v110
  %v1310 = vpop.permute.xlu0 %1309
  %1312 = vset.pattern.permute.xlu0 1
  %1313 = vperm.xlu0 %1312, %v111
  %v1314 = vpop.permute.xlu0 %1313
  %1316 = vset.pattern.permute.xlu0 1
  %1317 = vperm.xlu0 %1316, %v112
  %v1318 = vpop.permute.xlu0 %1317
  %1320 = vset.pattern.permute.xlu0 1
  %1321 = vperm.xlu0 %1320, %v113
  %v1322 = vpop.permute.xlu0 %1321
  %1324 = vset.pattern.permute.xlu0 1
  %1325 = vperm.xlu0 %1324, %v114
  %v1326 = vpop.permute.xlu0 %1325
  %1328 = vset.pattern.permute.xlu0 1
  %1329 = vperm.xlu0 %1328, %v115
  %v1330 = vpop.permute.xlu0 %1329
  %1332 = vset.pattern.permute.xlu0 1
  %1333 = vperm.xlu0 %1332, %v116
  %v1334 = vpop.permute.xlu0 %1333
  %1336 = vset.pattern.permute.xlu0 1
  %1337 = vperm.xlu0 %1336, %v117
  %v1338 = vpop.permute.xlu0 %1337
  %1340 = vset.pattern.permute.xlu0 1
  %1341 = vperm.xlu0 %1340, %v118
  %v1342 = vpop.permute.xlu0 %1341
  %1344 = vset.pattern.permute.xlu0 1
  %1345 = vperm.xlu0 %1344, %v119
  %v1346 = vpop.permute.xlu0 %1345
  %1348 = vset.pattern.permute.xlu0 1
  %1349 = vperm.xlu0 %1348, %v120
  %v1350 = vpop.permute.xlu0 %1349
  %1352 = vset.pattern.permute.xlu0 1
  %1353 = vperm.xlu0 %1352, %v121
  %v1354 = vpop.permute.xlu0 %1353
  %1356 = vset.pattern.permute.xlu0 1
  %1357 = vperm.xlu0 %1356, %v122
  %v1358 = vpop.permute.xlu0 %1357
  %1360 = vset.pattern.permute.xlu0 1
  %1361 = vperm.xlu0 %1360, %v123
  %v1362 = vpop.permute.xlu0 %1361
  %1364 = vset.pattern.permute.xlu0 1
  %1365 = vperm.xlu0 %1364, %v124
  %v1366 = vpop.permute.xlu0 %1365
  %1368 = vset.pattern.permute.xlu0 1
  %1369 = vperm.xlu0 %1368, %v125
  %v1370 = vpop.permute.xlu0 %1369
  %1372 = vset.pattern.permute.xlu0 1
  %1373 = vperm.xlu0 %1372, %v126
  %v1374 = vpop.permute.xlu0 %1373
  %1376 = vset.pattern.permute.xlu0 1
  %1377 = vperm.xlu0 %1376, %v127
  %v1378 = vpop.permute.xlu0 %1377
  %1380 = vset.pattern.permute.xlu0 1
  %1381 = vperm.xlu0 %1380, %v128
  %v1382 = vpop.permute.xlu0 %1381
  %1384 = vset.pattern.permute.xlu0 1
  %1385 = vperm.xlu0 %1384, %v129
  %v1386 = vpop.permute.xlu0 %1385
  %1388 = vset.pattern.permute.xlu0 1
  %1389 = vperm.xlu0 %1388, %v130
  %v1390 = vpop.permute.xlu0 %1389
  %1392 = vset.pattern.permute.xlu0 1
  %1393 = vperm.xlu0 %1392, %v131
  %v1394 = vpop.permute.xlu0 %1393
  %1396 = vset.pattern.permute.xlu0 1
  %1397 = vperm.xlu0 %1396, %v132
  %v1398 = vpop.permute.xlu0 %1397
  %1400 = vset.pattern.permute.xlu0 1
  %1401 = vperm.xlu0 %1400, %v133
  %v1402 = vpop.permute.xlu0 %1401
  %1404 = vset.pattern.permute.xlu0 1
  %1405 = vperm.xlu0 %1404, %v134
  %v1406 = vpop.permute.xlu0 %1405
  %1408 = vset.pattern.permute.xlu0 1
  %1409 = vperm.xlu0 %1408, %v135
  %v1410 = vpop.permute.xlu0 %1409
  %1412 = vset.pattern.permute.xlu0 1
  %1413 = vperm.xlu0 %1412, %v136
  %v1414 = vpop.permute.xlu0 %1413
  %1416 = vset.pattern.permute.xlu0 1
  %1417 = vperm.xlu0 %1416, %v137
  %v1418 = vpop.permute.xlu0 %1417
  %1420 = vset.pattern.permute.xlu0 1
  %1421 = vperm.xlu0 %1420, %v138
  %v1422 = vpop.permute.xlu0 %1421
  %v1424 = vlaneseq
  %v1425 = vshrl.u32 %v1424, 7
  %v1426 = vsub.s32 1, %v1425
  %v1427 = vrot.slane %v139, %v1426
  %v1428 = vmul.f32 %v914, %v1427
  %v1429 = vmul.f32 %v918, %v1427
  %v1430 = vmul.f32 %v922, %v1427
  %v1431 = vmul.f32 %v926, %v1427
  %v1432 = vmul.f32 %v930, %v1427
  %v1433 = vmul.f32 %v934, %v1427
  %v1434 = vmul.f32 %v938, %v1427
  %v1435 = vmul.f32 %v942, %v1427
  %v1436 = vmul.f32 %v946, %v1427
  %v1437 = vmul.f32 %v950, %v1427
  %v1438 = vmul.f32 %v954, %v1427
  %v1439 = vmul.f32 %v958, %v1427
  %v1440 = vmul.f32 %v962, %v1427
  %v1441 = vmul.f32 %v966, %v1427
  %v1442 = vmul.f32 %v970, %v1427
  %v1443 = vmul.f32 %v974, %v1427
  %v1444 = vmul.f32 %v978, %v1427
  %v1445 = vmul.f32 %v982, %v1427
  %v1446 = vmul.f32 %v986, %v1427
  %v1447 = vmul.f32 %v990, %v1427
  %v1448 = vmul.f32 %v994, %v1427
  %v1449 = vmul.f32 %v998, %v1427
  %v1450 = vmul.f32 %v1002, %v1427
  %v1451 = vmul.f32 %v1006, %v1427
  %v1452 = vmul.f32 %v1010, %v1427
  %v1453 = vmul.f32 %v1014, %v1427
  %v1454 = vmul.f32 %v1018, %v1427
  %v1455 = vmul.f32 %v1022, %v1427
  %v1456 = vmul.f32 %v1026, %v1427
  %v1457 = vmul.f32 %v1030, %v1427
  %v1458 = vmul.f32 %v1034, %v1427
  %v1459 = vmul.f32 %v1038, %v1427
  %v1460 = vmul.f32 %v1042, %v1427
  %v1461 = vmul.f32 %v1046, %v1427
  %v1462 = vmul.f32 %v1050, %v1427
  %v1463 = vmul.f32 %v1054, %v1427
  %v1464 = vmul.f32 %v1058, %v1427
  %v1465 = vmul.f32 %v1062, %v1427
  %v1466 = vmul.f32 %v1066, %v1427
  %v1467 = vmul.f32 %v1070, %v1427
  %v1468 = vmul.f32 %v1074, %v1427
  %v1469 = vmul.f32 %v1078, %v1427
  %v1470 = vmul.f32 %v1082, %v1427
  %v1471 = vmul.f32 %v1086, %v1427
  %v1472 = vmul.f32 %v1090, %v1427
  %v1473 = vmul.f32 %v1094, %v1427
  %v1474 = vmul.f32 %v1098, %v1427
  %v1475 = vmul.f32 %v1102, %v1427
  %v1476 = vmul.f32 %v1106, %v1427
  %v1477 = vmul.f32 %v1110, %v1427
  %v1478 = vmul.f32 %v1114, %v1427
  %v1479 = vmul.f32 %v1118, %v1427
  %v1480 = vmul.f32 %v1122, %v1427
  %v1481 = vmul.f32 %v1126, %v1427
  %v1482 = vmul.f32 %v1130, %v1427
  %v1483 = vmul.f32 %v1134, %v1427
  %v1484 = vmul.f32 %v1138, %v1427
  %v1485 = vmul.f32 %v1142, %v1427
  %v1486 = vmul.f32 %v1146, %v1427
  %v1487 = vmul.f32 %v1150, %v1427
  %v1488 = vmul.f32 %v1154, %v1427
  %v1489 = vmul.f32 %v1158, %v1427
  %v1490 = vmul.f32 %v1162, %v1427
  %v1491 = vmul.f32 %v1166, %v1427
  %v1492 = vmul.f32 %v1170, %v1427
  %v1493 = vmul.f32 %v1174, %v1427
  %v1494 = vmul.f32 %v1178, %v1427
  %v1495 = vmul.f32 %v1182, %v1427
  %v1496 = vmul.f32 %v1186, %v1427
  %v1497 = vmul.f32 %v1190, %v1427
  %v1498 = vmul.f32 %v1194, %v1427
  %v1499 = vmul.f32 %v1198, %v1427
  %v1500 = vmul.f32 %v1202, %v1427
  %v1501 = vmul.f32 %v1206, %v1427
  %v1502 = vmul.f32 %v1210, %v1427
  %v1503 = vmul.f32 %v1214, %v1427
  %v1504 = vmul.f32 %v1218, %v1427
  %v1505 = vmul.f32 %v1222, %v1427
  %v1506 = vmul.f32 %v1226, %v1427
  %v1507 = vmul.f32 %v1230, %v1427
  %v1508 = vmul.f32 %v1234, %v1427
  %v1509 = vmul.f32 %v1238, %v1427
  %v1510 = vmul.f32 %v1242, %v1427
  %v1511 = vmul.f32 %v1246, %v1427
  %v1512 = vmul.f32 %v1250, %v1427
  %v1513 = vmul.f32 %v1254, %v1427
  %v1514 = vmul.f32 %v1258, %v1427
  %v1515 = vmul.f32 %v1262, %v1427
  %v1516 = vmul.f32 %v1266, %v1427
  %v1517 = vmul.f32 %v1270, %v1427
  %v1518 = vmul.f32 %v1274, %v1427
  %v1519 = vmul.f32 %v1278, %v1427
  %v1520 = vmul.f32 %v1282, %v1427
  %v1521 = vmul.f32 %v1286, %v1427
  %v1522 = vmul.f32 %v1290, %v1427
  %v1523 = vmul.f32 %v1294, %v1427
  %v1524 = vmul.f32 %v1298, %v1427
  %v1525 = vmul.f32 %v1302, %v1427
  %v1526 = vmul.f32 %v1306, %v1427
  %v1527 = vmul.f32 %v1310, %v1427
  %v1528 = vmul.f32 %v1314, %v1427
  %v1529 = vmul.f32 %v1318, %v1427
  %v1530 = vmul.f32 %v1322, %v1427
  %v1531 = vmul.f32 %v1326, %v1427
  %v1532 = vmul.f32 %v1330, %v1427
  %v1533 = vmul.f32 %v1334, %v1427
  %v1534 = vmul.f32 %v1338, %v1427
  %v1535 = vmul.f32 %v1342, %v1427
  %v1536 = vmul.f32 %v1346, %v1427
  %v1537 = vmul.f32 %v1350, %v1427
  %v1538 = vmul.f32 %v1354, %v1427
  %v1539 = vmul.f32 %v1358, %v1427
  %v1540 = vmul.f32 %v1362, %v1427
  %v1541 = vmul.f32 %v1366, %v1427
  %v1542 = vmul.f32 %v1370, %v1427
  %v1543 = vmul.f32 %v1374, %v1427
  %v1544 = vmul.f32 %v1378, %v1427
  %v1545 = vmul.f32 %v1382, %v1427
  %v1546 = vmul.f32 %v1386, %v1427
  %v1547 = vmul.f32 %v1390, %v1427
  %v1548 = vmul.f32 %v1394, %v1427
  %v1549 = vmul.f32 %v1398, %v1427
  %v1550 = vmul.f32 %v1402, %v1427
  %v1551 = vmul.f32 %v1406, %v1427
  %v1552 = vmul.f32 %v1410, %v1427
  %v1553 = vmul.f32 %v1414, %v1427
  %v1554 = vmul.f32 %v1418, %v1427
  %v1555 = vmul.f32 %v1422, %v1427
  %v1556 = vadd.f32 %v784, %v1428
  %v1557 = vadd.f32 %v785, %v1429
  %v1558 = vadd.f32 %v786, %v1430
  %v1559 = vadd.f32 %v787, %v1431
  %v1560 = vadd.f32 %v788, %v1432
  %v1561 = vadd.f32 %v789, %v1433
  %v1562 = vadd.f32 %v790, %v1434
  %v1563 = vadd.f32 %v791, %v1435
  %v1564 = vadd.f32 %v792, %v1436
  %v1565 = vadd.f32 %v793, %v1437
  %v1566 = vadd.f32 %v794, %v1438
  %v1567 = vadd.f32 %v795, %v1439
  %v1568 = vadd.f32 %v796, %v1440
  %v1569 = vadd.f32 %v797, %v1441
  %v1570 = vadd.f32 %v798, %v1442
  %v1571 = vadd.f32 %v799, %v1443
  %v1572 = vadd.f32 %v800, %v1444
  %v1573 = vadd.f32 %v801, %v1445
  %v1574 = vadd.f32 %v802, %v1446
  %v1575 = vadd.f32 %v803, %v1447
  %v1576 = vadd.f32 %v804, %v1448
  %v1577 = vadd.f32 %v805, %v1449
  %v1578 = vadd.f32 %v806, %v1450
  %v1579 = vadd.f32 %v807, %v1451
  %v1580 = vadd.f32 %v808, %v1452
  %v1581 = vadd.f32 %v809, %v1453
  %v1582 = vadd.f32 %v810, %v1454
  %v1583 = vadd.f32 %v811, %v1455
  %v1584 = vadd.f32 %v812, %v1456
  %v1585 = vadd.f32 %v813, %v1457
  %v1586 = vadd.f32 %v814, %v1458
  %v1587 = vadd.f32 %v815, %v1459
  %v1588 = vadd.f32 %v816, %v1460
  %v1589 = vadd.f32 %v817, %v1461
  %v1590 = vadd.f32 %v818, %v1462
  %v1591 = vadd.f32 %v819, %v1463
  %v1592 = vadd.f32 %v820, %v1464
  %v1593 = vadd.f32 %v821, %v1465
  %v1594 = vadd.f32 %v822, %v1466
  %v1595 = vadd.f32 %v823, %v1467
  %v1596 = vadd.f32 %v824, %v1468
  %v1597 = vadd.f32 %v825, %v1469
  %v1598 = vadd.f32 %v826, %v1470
  %v1599 = vadd.f32 %v827, %v1471
  %v1600 = vadd.f32 %v828, %v1472
  %v1601 = vadd.f32 %v829, %v1473
  %v1602 = vadd.f32 %v830, %v1474
  %v1603 = vadd.f32 %v831, %v1475
  %v1604 = vadd.f32 %v832, %v1476
  %v1605 = vadd.f32 %v833, %v1477
  %v1606 = vadd.f32 %v834, %v1478
  %v1607 = vadd.f32 %v835, %v1479
  %v1608 = vadd.f32 %v836, %v1480
  %v1609 = vadd.f32 %v837, %v1481
  %v1610 = vadd.f32 %v838, %v1482
  %v1611 = vadd.f32 %v839, %v1483
  %v1612 = vadd.f32 %v840, %v1484
  %v1613 = vadd.f32 %v841, %v1485
  %v1614 = vadd.f32 %v842, %v1486
  %v1615 = vadd.f32 %v843, %v1487
  %v1616 = vadd.f32 %v844, %v1488
  %v1617 = vadd.f32 %v845, %v1489
  %v1618 = vadd.f32 %v846, %v1490
  %v1619 = vadd.f32 %v847, %v1491
  %v1620 = vadd.f32 %v848, %v1492
  %v1621 = vadd.f32 %v849, %v1493
  %v1622 = vadd.f32 %v850, %v1494
  %v1623 = vadd.f32 %v851, %v1495
  %v1624 = vadd.f32 %v852, %v1496
  %v1625 = vadd.f32 %v853, %v1497
  %v1626 = vadd.f32 %v854, %v1498
  %v1627 = vadd.f32 %v855, %v1499
  %v1628 = vadd.f32 %v856, %v1500
  %v1629 = vadd.f32 %v857, %v1501
  %v1630 = vadd.f32 %v858, %v1502
  %v1631 = vadd.f32 %v859, %v1503
  %v1632 = vadd.f32 %v860, %v1504
  %v1633 = vadd.f32 %v861, %v1505
  %v1634 = vadd.f32 %v862, %v1506
  %v1635 = vadd.f32 %v863, %v1507
  %v1636 = vadd.f32 %v864, %v1508
  %v1637 = vadd.f32 %v865, %v1509
  %v1638 = vadd.f32 %v866, %v1510
  %v1639 = vadd.f32 %v867, %v1511
  %v1640 = vadd.f32 %v868, %v1512
  %v1641 = vadd.f32 %v869, %v1513
  %v1642 = vadd.f32 %v870, %v1514
  %v1643 = vadd.f32 %v871, %v1515
  %v1644 = vadd.f32 %v872, %v1516
  %v1645 = vadd.f32 %v873, %v1517
  %v1646 = vadd.f32 %v874, %v1518
  %v1647 = vadd.f32 %v875, %v1519
  %v1648 = vadd.f32 %v876, %v1520
  %v1649 = vadd.f32 %v877, %v1521
  %v1650 = vadd.f32 %v878, %v1522
  %v1651 = vadd.f32 %v879, %v1523
  %v1652 = vadd.f32 %v880, %v1524
  %v1653 = vadd.f32 %v881, %v1525
  %v1654 = vadd.f32 %v882, %v1526
  %v1655 = vadd.f32 %v883, %v1527
  %v1656 = vadd.f32 %v884, %v1528
  %v1657 = vadd.f32 %v885, %v1529
  %v1658 = vadd.f32 %v886, %v1530
  %v1659 = vadd.f32 %v887, %v1531
  %v1660 = vadd.f32 %v888, %v1532
  %v1661 = vadd.f32 %v889, %v1533
  %v1662 = vadd.f32 %v890, %v1534
  %v1663 = vadd.f32 %v891, %v1535
  %v1664 = vadd.f32 %v892, %v1536
  %v1665 = vadd.f32 %v893, %v1537
  %v1666 = vadd.f32 %v894, %v1538
  %v1667 = vadd.f32 %v895, %v1539
  %v1668 = vadd.f32 %v896, %v1540
  %v1669 = vadd.f32 %v897, %v1541
  %v1670 = vadd.f32 %v898, %v1542
  %v1671 = vadd.f32 %v899, %v1543
  %v1672 = vadd.f32 %v900, %v1544
  %v1673 = vadd.f32 %v901, %v1545
  %v1674 = vadd.f32 %v902, %v1546
  %v1675 = vadd.f32 %v903, %v1547
  %v1676 = vadd.f32 %v904, %v1548
  %v1677 = vadd.f32 %v905, %v1549
  %v1678 = vadd.f32 %v906, %v1550
  %v1679 = vadd.f32 %v907, %v1551
  %v1680 = vadd.f32 %v908, %v1552
  %v1681 = vadd.f32 %v909, %v1553
  %v1682 = vadd.f32 %v910, %v1554
  %v1683 = vadd.f32 %v911, %v1555
  %1684 = vset.pattern.permute.xlu0 2
  %1685 = vperm.xlu0 %1684, %v11
  %v1686 = vpop.permute.xlu0 %1685
  %1688 = vset.pattern.permute.xlu0 2
  %1689 = vperm.xlu0 %1688, %v12
  %v1690 = vpop.permute.xlu0 %1689
  %1692 = vset.pattern.permute.xlu0 2
  %1693 = vperm.xlu0 %1692, %v13
  %v1694 = vpop.permute.xlu0 %1693
  %1696 = vset.pattern.permute.xlu0 2
  %1697 = vperm.xlu0 %1696, %v14
  %v1698 = vpop.permute.xlu0 %1697
  %1700 = vset.pattern.permute.xlu0 2
  %1701 = vperm.xlu0 %1700, %v15
  %v1702 = vpop.permute.xlu0 %1701
  %1704 = vset.pattern.permute.xlu0 2
  %1705 = vperm.xlu0 %1704, %v16
  %v1706 = vpop.permute.xlu0 %1705
  %1708 = vset.pattern.permute.xlu0 2
  %1709 = vperm.xlu0 %1708, %v17
  %v1710 = vpop.permute.xlu0 %1709
  %1712 = vset.pattern.permute.xlu0 2
  %1713 = vperm.xlu0 %1712, %v18
  %v1714 = vpop.permute.xlu0 %1713
  %1716 = vset.pattern.permute.xlu0 2
  %1717 = vperm.xlu0 %1716, %v19
  %v1718 = vpop.permute.xlu0 %1717
  %1720 = vset.pattern.permute.xlu0 2
  %1721 = vperm.xlu0 %1720, %v20
  %v1722 = vpop.permute.xlu0 %1721
  %1724 = vset.pattern.permute.xlu0 2
  %1725 = vperm.xlu0 %1724, %v21
  %v1726 = vpop.permute.xlu0 %1725
  %1728 = vset.pattern.permute.xlu0 2
  %1729 = vperm.xlu0 %1728, %v22
  %v1730 = vpop.permute.xlu0 %1729
  %1732 = vset.pattern.permute.xlu0 2
  %1733 = vperm.xlu0 %1732, %v23
  %v1734 = vpop.permute.xlu0 %1733
  %1736 = vset.pattern.permute.xlu0 2
  %1737 = vperm.xlu0 %1736, %v24
  %v1738 = vpop.permute.xlu0 %1737
  %1740 = vset.pattern.permute.xlu0 2
  %1741 = vperm.xlu0 %1740, %v25
  %v1742 = vpop.permute.xlu0 %1741
  %1744 = vset.pattern.permute.xlu0 2
  %1745 = vperm.xlu0 %1744, %v26
  %v1746 = vpop.permute.xlu0 %1745
  %1748 = vset.pattern.permute.xlu0 2
  %1749 = vperm.xlu0 %1748, %v27
  %v1750 = vpop.permute.xlu0 %1749
  %1752 = vset.pattern.permute.xlu0 2
  %1753 = vperm.xlu0 %1752, %v28
  %v1754 = vpop.permute.xlu0 %1753
  %1756 = vset.pattern.permute.xlu0 2
  %1757 = vperm.xlu0 %1756, %v29
  %v1758 = vpop.permute.xlu0 %1757
  %1760 = vset.pattern.permute.xlu0 2
  %1761 = vperm.xlu0 %1760, %v30
  %v1762 = vpop.permute.xlu0 %1761
  %1764 = vset.pattern.permute.xlu0 2
  %1765 = vperm.xlu0 %1764, %v31
  %v1766 = vpop.permute.xlu0 %1765
  %1768 = vset.pattern.permute.xlu0 2
  %1769 = vperm.xlu0 %1768, %v32
  %v1770 = vpop.permute.xlu0 %1769
  %1772 = vset.pattern.permute.xlu0 2
  %1773 = vperm.xlu0 %1772, %v33
  %v1774 = vpop.permute.xlu0 %1773
  %1776 = vset.pattern.permute.xlu0 2
  %1777 = vperm.xlu0 %1776, %v34
  %v1778 = vpop.permute.xlu0 %1777
  %1780 = vset.pattern.permute.xlu0 2
  %1781 = vperm.xlu0 %1780, %v35
  %v1782 = vpop.permute.xlu0 %1781
  %1784 = vset.pattern.permute.xlu0 2
  %1785 = vperm.xlu0 %1784, %v36
  %v1786 = vpop.permute.xlu0 %1785
  %1788 = vset.pattern.permute.xlu0 2
  %1789 = vperm.xlu0 %1788, %v37
  %v1790 = vpop.permute.xlu0 %1789
  %1792 = vset.pattern.permute.xlu0 2
  %1793 = vperm.xlu0 %1792, %v38
  %v1794 = vpop.permute.xlu0 %1793
  %1796 = vset.pattern.permute.xlu0 2
  %1797 = vperm.xlu0 %1796, %v39
  %v1798 = vpop.permute.xlu0 %1797
  %1800 = vset.pattern.permute.xlu0 2
  %1801 = vperm.xlu0 %1800, %v40
  %v1802 = vpop.permute.xlu0 %1801
  %1804 = vset.pattern.permute.xlu0 2
  %1805 = vperm.xlu0 %1804, %v41
  %v1806 = vpop.permute.xlu0 %1805
  %1808 = vset.pattern.permute.xlu0 2
  %1809 = vperm.xlu0 %1808, %v42
  %v1810 = vpop.permute.xlu0 %1809
  %1812 = vset.pattern.permute.xlu0 2
  %1813 = vperm.xlu0 %1812, %v43
  %v1814 = vpop.permute.xlu0 %1813
  %1816 = vset.pattern.permute.xlu0 2
  %1817 = vperm.xlu0 %1816, %v44
  %v1818 = vpop.permute.xlu0 %1817
  %1820 = vset.pattern.permute.xlu0 2
  %1821 = vperm.xlu0 %1820, %v45
  %v1822 = vpop.permute.xlu0 %1821
  %1824 = vset.pattern.permute.xlu0 2
  %1825 = vperm.xlu0 %1824, %v46
  %v1826 = vpop.permute.xlu0 %1825
  %1828 = vset.pattern.permute.xlu0 2
  %1829 = vperm.xlu0 %1828, %v47
  %v1830 = vpop.permute.xlu0 %1829
  %1832 = vset.pattern.permute.xlu0 2
  %1833 = vperm.xlu0 %1832, %v48
  %v1834 = vpop.permute.xlu0 %1833
  %1836 = vset.pattern.permute.xlu0 2
  %1837 = vperm.xlu0 %1836, %v49
  %v1838 = vpop.permute.xlu0 %1837
  %1840 = vset.pattern.permute.xlu0 2
  %1841 = vperm.xlu0 %1840, %v50
  %v1842 = vpop.permute.xlu0 %1841
  %1844 = vset.pattern.permute.xlu0 2
  %1845 = vperm.xlu0 %1844, %v51
  %v1846 = vpop.permute.xlu0 %1845
  %1848 = vset.pattern.permute.xlu0 2
  %1849 = vperm.xlu0 %1848, %v52
  %v1850 = vpop.permute.xlu0 %1849
  %1852 = vset.pattern.permute.xlu0 2
  %1853 = vperm.xlu0 %1852, %v53
  %v1854 = vpop.permute.xlu0 %1853
  %1856 = vset.pattern.permute.xlu0 2
  %1857 = vperm.xlu0 %1856, %v54
  %v1858 = vpop.permute.xlu0 %1857
  %1860 = vset.pattern.permute.xlu0 2
  %1861 = vperm.xlu0 %1860, %v55
  %v1862 = vpop.permute.xlu0 %1861
  %1864 = vset.pattern.permute.xlu0 2
  %1865 = vperm.xlu0 %1864, %v56
  %v1866 = vpop.permute.xlu0 %1865
  %1868 = vset.pattern.permute.xlu0 2
  %1869 = vperm.xlu0 %1868, %v57
  %v1870 = vpop.permute.xlu0 %1869
  %1872 = vset.pattern.permute.xlu0 2
  %1873 = vperm.xlu0 %1872, %v58
  %v1874 = vpop.permute.xlu0 %1873
  %1876 = vset.pattern.permute.xlu0 2
  %1877 = vperm.xlu0 %1876, %v59
  %v1878 = vpop.permute.xlu0 %1877
  %1880 = vset.pattern.permute.xlu0 2
  %1881 = vperm.xlu0 %1880, %v60
  %v1882 = vpop.permute.xlu0 %1881
  %1884 = vset.pattern.permute.xlu0 2
  %1885 = vperm.xlu0 %1884, %v61
  %v1886 = vpop.permute.xlu0 %1885
  %1888 = vset.pattern.permute.xlu0 2
  %1889 = vperm.xlu0 %1888, %v62
  %v1890 = vpop.permute.xlu0 %1889
  %1892 = vset.pattern.permute.xlu0 2
  %1893 = vperm.xlu0 %1892, %v63
  %v1894 = vpop.permute.xlu0 %1893
  %1896 = vset.pattern.permute.xlu0 2
  %1897 = vperm.xlu0 %1896, %v64
  %v1898 = vpop.permute.xlu0 %1897
  %1900 = vset.pattern.permute.xlu0 2
  %1901 = vperm.xlu0 %1900, %v65
  %v1902 = vpop.permute.xlu0 %1901
  %1904 = vset.pattern.permute.xlu0 2
  %1905 = vperm.xlu0 %1904, %v66
  %v1906 = vpop.permute.xlu0 %1905
  %1908 = vset.pattern.permute.xlu0 2
  %1909 = vperm.xlu0 %1908, %v67
  %v1910 = vpop.permute.xlu0 %1909
  %1912 = vset.pattern.permute.xlu0 2
  %1913 = vperm.xlu0 %1912, %v68
  %v1914 = vpop.permute.xlu0 %1913
  %1916 = vset.pattern.permute.xlu0 2
  %1917 = vperm.xlu0 %1916, %v69
  %v1918 = vpop.permute.xlu0 %1917
  %1920 = vset.pattern.permute.xlu0 2
  %1921 = vperm.xlu0 %1920, %v70
  %v1922 = vpop.permute.xlu0 %1921
  %1924 = vset.pattern.permute.xlu0 2
  %1925 = vperm.xlu0 %1924, %v71
  %v1926 = vpop.permute.xlu0 %1925
  %1928 = vset.pattern.permute.xlu0 2
  %1929 = vperm.xlu0 %1928, %v72
  %v1930 = vpop.permute.xlu0 %1929
  %1932 = vset.pattern.permute.xlu0 2
  %1933 = vperm.xlu0 %1932, %v73
  %v1934 = vpop.permute.xlu0 %1933
  %1936 = vset.pattern.permute.xlu0 2
  %1937 = vperm.xlu0 %1936, %v74
  %v1938 = vpop.permute.xlu0 %1937
  %1940 = vset.pattern.permute.xlu0 2
  %1941 = vperm.xlu0 %1940, %v75
  %v1942 = vpop.permute.xlu0 %1941
  %1944 = vset.pattern.permute.xlu0 2
  %1945 = vperm.xlu0 %1944, %v76
  %v1946 = vpop.permute.xlu0 %1945
  %1948 = vset.pattern.permute.xlu0 2
  %1949 = vperm.xlu0 %1948, %v77
  %v1950 = vpop.permute.xlu0 %1949
  %1952 = vset.pattern.permute.xlu0 2
  %1953 = vperm.xlu0 %1952, %v78
  %v1954 = vpop.permute.xlu0 %1953
  %1956 = vset.pattern.permute.xlu0 2
  %1957 = vperm.xlu0 %1956, %v79
  %v1958 = vpop.permute.xlu0 %1957
  %1960 = vset.pattern.permute.xlu0 2
  %1961 = vperm.xlu0 %1960, %v80
  %v1962 = vpop.permute.xlu0 %1961
  %1964 = vset.pattern.permute.xlu0 2
  %1965 = vperm.xlu0 %1964, %v81
  %v1966 = vpop.permute.xlu0 %1965
  %1968 = vset.pattern.permute.xlu0 2
  %1969 = vperm.xlu0 %1968, %v82
  %v1970 = vpop.permute.xlu0 %1969
  %1972 = vset.pattern.permute.xlu0 2
  %1973 = vperm.xlu0 %1972, %v83
  %v1974 = vpop.permute.xlu0 %1973
  %1976 = vset.pattern.permute.xlu0 2
  %1977 = vperm.xlu0 %1976, %v84
  %v1978 = vpop.permute.xlu0 %1977
  %1980 = vset.pattern.permute.xlu0 2
  %1981 = vperm.xlu0 %1980, %v85
  %v1982 = vpop.permute.xlu0 %1981
  %1984 = vset.pattern.permute.xlu0 2
  %1985 = vperm.xlu0 %1984, %v86
  %v1986 = vpop.permute.xlu0 %1985
  %1988 = vset.pattern.permute.xlu0 2
  %1989 = vperm.xlu0 %1988, %v87
  %v1990 = vpop.permute.xlu0 %1989
  %1992 = vset.pattern.permute.xlu0 2
  %1993 = vperm.xlu0 %1992, %v88
  %v1994 = vpop.permute.xlu0 %1993
  %1996 = vset.pattern.permute.xlu0 2
  %1997 = vperm.xlu0 %1996, %v89
  %v1998 = vpop.permute.xlu0 %1997
  %2000 = vset.pattern.permute.xlu0 2
  %2001 = vperm.xlu0 %2000, %v90
  %v2002 = vpop.permute.xlu0 %2001
  %2004 = vset.pattern.permute.xlu0 2
  %2005 = vperm.xlu0 %2004, %v91
  %v2006 = vpop.permute.xlu0 %2005
  %2008 = vset.pattern.permute.xlu0 2
  %2009 = vperm.xlu0 %2008, %v92
  %v2010 = vpop.permute.xlu0 %2009
  %2012 = vset.pattern.permute.xlu0 2
  %2013 = vperm.xlu0 %2012, %v93
  %v2014 = vpop.permute.xlu0 %2013
  %2016 = vset.pattern.permute.xlu0 2
  %2017 = vperm.xlu0 %2016, %v94
  %v2018 = vpop.permute.xlu0 %2017
  %2020 = vset.pattern.permute.xlu0 2
  %2021 = vperm.xlu0 %2020, %v95
  %v2022 = vpop.permute.xlu0 %2021
  %2024 = vset.pattern.permute.xlu0 2
  %2025 = vperm.xlu0 %2024, %v96
  %v2026 = vpop.permute.xlu0 %2025
  %2028 = vset.pattern.permute.xlu0 2
  %2029 = vperm.xlu0 %2028, %v97
  %v2030 = vpop.permute.xlu0 %2029
  %2032 = vset.pattern.permute.xlu0 2
  %2033 = vperm.xlu0 %2032, %v98
  %v2034 = vpop.permute.xlu0 %2033
  %2036 = vset.pattern.permute.xlu0 2
  %2037 = vperm.xlu0 %2036, %v99
  %v2038 = vpop.permute.xlu0 %2037
  %2040 = vset.pattern.permute.xlu0 2
  %2041 = vperm.xlu0 %2040, %v100
  %v2042 = vpop.permute.xlu0 %2041
  %2044 = vset.pattern.permute.xlu0 2
  %2045 = vperm.xlu0 %2044, %v101
  %v2046 = vpop.permute.xlu0 %2045
  %2048 = vset.pattern.permute.xlu0 2
  %2049 = vperm.xlu0 %2048, %v102
  %v2050 = vpop.permute.xlu0 %2049
  %2052 = vset.pattern.permute.xlu0 2
  %2053 = vperm.xlu0 %2052, %v103
  %v2054 = vpop.permute.xlu0 %2053
  %2056 = vset.pattern.permute.xlu0 2
  %2057 = vperm.xlu0 %2056, %v104
  %v2058 = vpop.permute.xlu0 %2057
  %2060 = vset.pattern.permute.xlu0 2
  %2061 = vperm.xlu0 %2060, %v105
  %v2062 = vpop.permute.xlu0 %2061
  %2064 = vset.pattern.permute.xlu0 2
  %2065 = vperm.xlu0 %2064, %v106
  %v2066 = vpop.permute.xlu0 %2065
  %2068 = vset.pattern.permute.xlu0 2
  %2069 = vperm.xlu0 %2068, %v107
  %v2070 = vpop.permute.xlu0 %2069
  %2072 = vset.pattern.permute.xlu0 2
  %2073 = vperm.xlu0 %2072, %v108
  %v2074 = vpop.permute.xlu0 %2073
  %2076 = vset.pattern.permute.xlu0 2
  %2077 = vperm.xlu0 %2076, %v109
  %v2078 = vpop.permute.xlu0 %2077
  %2080 = vset.pattern.permute.xlu0 2
  %2081 = vperm.xlu0 %2080, %v110
  %v2082 = vpop.permute.xlu0 %2081
  %2084 = vset.pattern.permute.xlu0 2
  %2085 = vperm.xlu0 %2084, %v111
  %v2086 = vpop.permute.xlu0 %2085
  %2088 = vset.pattern.permute.xlu0 2
  %2089 = vperm.xlu0 %2088, %v112
  %v2090 = vpop.permute.xlu0 %2089
  %2092 = vset.pattern.permute.xlu0 2
  %2093 = vperm.xlu0 %2092, %v113
  %v2094 = vpop.permute.xlu0 %2093
  %2096 = vset.pattern.permute.xlu0 2
  %2097 = vperm.xlu0 %2096, %v114
  %v2098 = vpop.permute.xlu0 %2097
  %2100 = vset.pattern.permute.xlu0 2
  %2101 = vperm.xlu0 %2100, %v115
  %v2102 = vpop.permute.xlu0 %2101
  %2104 = vset.pattern.permute.xlu0 2
  %2105 = vperm.xlu0 %2104, %v116
  %v2106 = vpop.permute.xlu0 %2105
  %2108 = vset.pattern.permute.xlu0 2
  %2109 = vperm.xlu0 %2108, %v117
  %v2110 = vpop.permute.xlu0 %2109
  %2112 = vset.pattern.permute.xlu0 2
  %2113 = vperm.xlu0 %2112, %v118
  %v2114 = vpop.permute.xlu0 %2113
  %2116 = vset.pattern.permute.xlu0 2
  %2117 = vperm.xlu0 %2116, %v119
  %v2118 = vpop.permute.xlu0 %2117
  %2120 = vset.pattern.permute.xlu0 2
  %2121 = vperm.xlu0 %2120, %v120
  %v2122 = vpop.permute.xlu0 %2121
  %2124 = vset.pattern.permute.xlu0 2
  %2125 = vperm.xlu0 %2124, %v121
  %v2126 = vpop.permute.xlu0 %2125
  %2128 = vset.pattern.permute.xlu0 2
  %2129 = vperm.xlu0 %2128, %v122
  %v2130 = vpop.permute.xlu0 %2129
  %2132 = vset.pattern.permute.xlu0 2
  %2133 = vperm.xlu0 %2132, %v123
  %v2134 = vpop.permute.xlu0 %2133
  %2136 = vset.pattern.permute.xlu0 2
  %2137 = vperm.xlu0 %2136, %v124
  %v2138 = vpop.permute.xlu0 %2137
  %2140 = vset.pattern.permute.xlu0 2
  %2141 = vperm.xlu0 %2140, %v125
  %v2142 = vpop.permute.xlu0 %2141
  %2144 = vset.pattern.permute.xlu0 2
  %2145 = vperm.xlu0 %2144, %v126
  %v2146 = vpop.permute.xlu0 %2145
  %2148 = vset.pattern.permute.xlu0 2
  %2149 = vperm.xlu0 %2148, %v127
  %v2150 = vpop.permute.xlu0 %2149
  %2152 = vset.pattern.permute.xlu0 2
  %2153 = vperm.xlu0 %2152, %v128
  %v2154 = vpop.permute.xlu0 %2153
  %2156 = vset.pattern.permute.xlu0 2
  %2157 = vperm.xlu0 %2156, %v129
  %v2158 = vpop.permute.xlu0 %2157
  %2160 = vset.pattern.permute.xlu0 2
  %2161 = vperm.xlu0 %2160, %v130
  %v2162 = vpop.permute.xlu0 %2161
  %2164 = vset.pattern.permute.xlu0 2
  %2165 = vperm.xlu0 %2164, %v131
  %v2166 = vpop.permute.xlu0 %2165
  %2168 = vset.pattern.permute.xlu0 2
  %2169 = vperm.xlu0 %2168, %v132
  %v2170 = vpop.permute.xlu0 %2169
  %2172 = vset.pattern.permute.xlu0 2
  %2173 = vperm.xlu0 %2172, %v133
  %v2174 = vpop.permute.xlu0 %2173
  %2176 = vset.pattern.permute.xlu0 2
  %2177 = vperm.xlu0 %2176, %v134
  %v2178 = vpop.permute.xlu0 %2177
  %2180 = vset.pattern.permute.xlu0 2
  %2181 = vperm.xlu0 %2180, %v135
  %v2182 = vpop.permute.xlu0 %2181
  %2184 = vset.pattern.permute.xlu0 2
  %2185 = vperm.xlu0 %2184, %v136
  %v2186 = vpop.permute.xlu0 %2185
  %2188 = vset.pattern.permute.xlu0 2
  %2189 = vperm.xlu0 %2188, %v137
  %v2190 = vpop.permute.xlu0 %2189
  %2192 = vset.pattern.permute.xlu0 2
  %2193 = vperm.xlu0 %2192, %v138
  %v2194 = vpop.permute.xlu0 %2193
  %v2196 = vlaneseq
  %v2197 = vshrl.u32 %v2196, 7
  %v2198 = vsub.s32 2, %v2197
  %v2199 = vrot.slane %v139, %v2198
  %v2200 = vmul.f32 %v1686, %v2199
  %v2201 = vmul.f32 %v1690, %v2199
  %v2202 = vmul.f32 %v1694, %v2199
  %v2203 = vmul.f32 %v1698, %v2199
  %v2204 = vmul.f32 %v1702, %v2199
  %v2205 = vmul.f32 %v1706, %v2199
  %v2206 = vmul.f32 %v1710, %v2199
  %v2207 = vmul.f32 %v1714, %v2199
  %v2208 = vmul.f32 %v1718, %v2199
  %v2209 = vmul.f32 %v1722, %v2199
  %v2210 = vmul.f32 %v1726, %v2199
  %v2211 = vmul.f32 %v1730, %v2199
  %v2212 = vmul.f32 %v1734, %v2199
  %v2213 = vmul.f32 %v1738, %v2199
  %v2214 = vmul.f32 %v1742, %v2199
  %v2215 = vmul.f32 %v1746, %v2199
  %v2216 = vmul.f32 %v1750, %v2199
  %v2217 = vmul.f32 %v1754, %v2199
  %v2218 = vmul.f32 %v1758, %v2199
  %v2219 = vmul.f32 %v1762, %v2199
  %v2220 = vmul.f32 %v1766, %v2199
  %v2221 = vmul.f32 %v1770, %v2199
  %v2222 = vmul.f32 %v1774, %v2199
  %v2223 = vmul.f32 %v1778, %v2199
  %v2224 = vmul.f32 %v1782, %v2199
  %v2225 = vmul.f32 %v1786, %v2199
  %v2226 = vmul.f32 %v1790, %v2199
  %v2227 = vmul.f32 %v1794, %v2199
  %v2228 = vmul.f32 %v1798, %v2199
  %v2229 = vmul.f32 %v1802, %v2199
  %v2230 = vmul.f32 %v1806, %v2199
  %v2231 = vmul.f32 %v1810, %v2199
  %v2232 = vmul.f32 %v1814, %v2199
  %v2233 = vmul.f32 %v1818, %v2199
  %v2234 = vmul.f32 %v1822, %v2199
  %v2235 = vmul.f32 %v1826, %v2199
  %v2236 = vmul.f32 %v1830, %v2199
  %v2237 = vmul.f32 %v1834, %v2199
  %v2238 = vmul.f32 %v1838, %v2199
  %v2239 = vmul.f32 %v1842, %v2199
  %v2240 = vmul.f32 %v1846, %v2199
  %v2241 = vmul.f32 %v1850, %v2199
  %v2242 = vmul.f32 %v1854, %v2199
  %v2243 = vmul.f32 %v1858, %v2199
  %v2244 = vmul.f32 %v1862, %v2199
  %v2245 = vmul.f32 %v1866, %v2199
  %v2246 = vmul.f32 %v1870, %v2199
  %v2247 = vmul.f32 %v1874, %v2199
  %v2248 = vmul.f32 %v1878, %v2199
  %v2249 = vmul.f32 %v1882, %v2199
  %v2250 = vmul.f32 %v1886, %v2199
  %v2251 = vmul.f32 %v1890, %v2199
  %v2252 = vmul.f32 %v1894, %v2199
  %v2253 = vmul.f32 %v1898, %v2199
  %v2254 = vmul.f32 %v1902, %v2199
  %v2255 = vmul.f32 %v1906, %v2199
  %v2256 = vmul.f32 %v1910, %v2199
  %v2257 = vmul.f32 %v1914, %v2199
  %v2258 = vmul.f32 %v1918, %v2199
  %v2259 = vmul.f32 %v1922, %v2199
  %v2260 = vmul.f32 %v1926, %v2199
  %v2261 = vmul.f32 %v1930, %v2199
  %v2262 = vmul.f32 %v1934, %v2199
  %v2263 = vmul.f32 %v1938, %v2199
  %v2264 = vmul.f32 %v1942, %v2199
  %v2265 = vmul.f32 %v1946, %v2199
  %v2266 = vmul.f32 %v1950, %v2199
  %v2267 = vmul.f32 %v1954, %v2199
  %v2268 = vmul.f32 %v1958, %v2199
  %v2269 = vmul.f32 %v1962, %v2199
  %v2270 = vmul.f32 %v1966, %v2199
  %v2271 = vmul.f32 %v1970, %v2199
  %v2272 = vmul.f32 %v1974, %v2199
  %v2273 = vmul.f32 %v1978, %v2199
  %v2274 = vmul.f32 %v1982, %v2199
  %v2275 = vmul.f32 %v1986, %v2199
  %v2276 = vmul.f32 %v1990, %v2199
  %v2277 = vmul.f32 %v1994, %v2199
  %v2278 = vmul.f32 %v1998, %v2199
  %v2279 = vmul.f32 %v2002, %v2199
  %v2280 = vmul.f32 %v2006, %v2199
  %v2281 = vmul.f32 %v2010, %v2199
  %v2282 = vmul.f32 %v2014, %v2199
  %v2283 = vmul.f32 %v2018, %v2199
  %v2284 = vmul.f32 %v2022, %v2199
  %v2285 = vmul.f32 %v2026, %v2199
  %v2286 = vmul.f32 %v2030, %v2199
  %v2287 = vmul.f32 %v2034, %v2199
  %v2288 = vmul.f32 %v2038, %v2199
  %v2289 = vmul.f32 %v2042, %v2199
  %v2290 = vmul.f32 %v2046, %v2199
  %v2291 = vmul.f32 %v2050, %v2199
  %v2292 = vmul.f32 %v2054, %v2199
  %v2293 = vmul.f32 %v2058, %v2199
  %v2294 = vmul.f32 %v2062, %v2199
  %v2295 = vmul.f32 %v2066, %v2199
  %v2296 = vmul.f32 %v2070, %v2199
  %v2297 = vmul.f32 %v2074, %v2199
  %v2298 = vmul.f32 %v2078, %v2199
  %v2299 = vmul.f32 %v2082, %v2199
  %v2300 = vmul.f32 %v2086, %v2199
  %v2301 = vmul.f32 %v2090, %v2199
  %v2302 = vmul.f32 %v2094, %v2199
  %v2303 = vmul.f32 %v2098, %v2199
  %v2304 = vmul.f32 %v2102, %v2199
  %v2305 = vmul.f32 %v2106, %v2199
  %v2306 = vmul.f32 %v2110, %v2199
  %v2307 = vmul.f32 %v2114, %v2199
  %v2308 = vmul.f32 %v2118, %v2199
  %v2309 = vmul.f32 %v2122, %v2199
  %v2310 = vmul.f32 %v2126, %v2199
  %v2311 = vmul.f32 %v2130, %v2199
  %v2312 = vmul.f32 %v2134, %v2199
  %v2313 = vmul.f32 %v2138, %v2199
  %v2314 = vmul.f32 %v2142, %v2199
  %v2315 = vmul.f32 %v2146, %v2199
  %v2316 = vmul.f32 %v2150, %v2199
  %v2317 = vmul.f32 %v2154, %v2199
  %v2318 = vmul.f32 %v2158, %v2199
  %v2319 = vmul.f32 %v2162, %v2199
  %v2320 = vmul.f32 %v2166, %v2199
  %v2321 = vmul.f32 %v2170, %v2199
  %v2322 = vmul.f32 %v2174, %v2199
  %v2323 = vmul.f32 %v2178, %v2199
  %v2324 = vmul.f32 %v2182, %v2199
  %v2325 = vmul.f32 %v2186, %v2199
  %v2326 = vmul.f32 %v2190, %v2199
  %v2327 = vmul.f32 %v2194, %v2199
  %v2328 = vadd.f32 %v1556, %v2200
  %v2329 = vadd.f32 %v1557, %v2201
  %v2330 = vadd.f32 %v1558, %v2202
  %v2331 = vadd.f32 %v1559, %v2203
  %v2332 = vadd.f32 %v1560, %v2204
  %v2333 = vadd.f32 %v1561, %v2205
  %v2334 = vadd.f32 %v1562, %v2206
  %v2335 = vadd.f32 %v1563, %v2207
  %v2336 = vadd.f32 %v1564, %v2208
  %v2337 = vadd.f32 %v1565, %v2209
  %v2338 = vadd.f32 %v1566, %v2210
  %v2339 = vadd.f32 %v1567, %v2211
  %v2340 = vadd.f32 %v1568, %v2212
  %v2341 = vadd.f32 %v1569, %v2213
  %v2342 = vadd.f32 %v1570, %v2214
  %v2343 = vadd.f32 %v1571, %v2215
  %v2344 = vadd.f32 %v1572, %v2216
  %v2345 = vadd.f32 %v1573, %v2217
  %v2346 = vadd.f32 %v1574, %v2218
  %v2347 = vadd.f32 %v1575, %v2219
  %v2348 = vadd.f32 %v1576, %v2220
  %v2349 = vadd.f32 %v1577, %v2221
  %v2350 = vadd.f32 %v1578, %v2222
  %v2351 = vadd.f32 %v1579, %v2223
  %v2352 = vadd.f32 %v1580, %v2224
  %v2353 = vadd.f32 %v1581, %v2225
  %v2354 = vadd.f32 %v1582, %v2226
  %v2355 = vadd.f32 %v1583, %v2227
  %v2356 = vadd.f32 %v1584, %v2228
  %v2357 = vadd.f32 %v1585, %v2229
  %v2358 = vadd.f32 %v1586, %v2230
  %v2359 = vadd.f32 %v1587, %v2231
  %v2360 = vadd.f32 %v1588, %v2232
  %v2361 = vadd.f32 %v1589, %v2233
  %v2362 = vadd.f32 %v1590, %v2234
  %v2363 = vadd.f32 %v1591, %v2235
  %v2364 = vadd.f32 %v1592, %v2236
  %v2365 = vadd.f32 %v1593, %v2237
  %v2366 = vadd.f32 %v1594, %v2238
  %v2367 = vadd.f32 %v1595, %v2239
  %v2368 = vadd.f32 %v1596, %v2240
  %v2369 = vadd.f32 %v1597, %v2241
  %v2370 = vadd.f32 %v1598, %v2242
  %v2371 = vadd.f32 %v1599, %v2243
  %v2372 = vadd.f32 %v1600, %v2244
  %v2373 = vadd.f32 %v1601, %v2245
  %v2374 = vadd.f32 %v1602, %v2246
  %v2375 = vadd.f32 %v1603, %v2247
  %v2376 = vadd.f32 %v1604, %v2248
  %v2377 = vadd.f32 %v1605, %v2249
  %v2378 = vadd.f32 %v1606, %v2250
  %v2379 = vadd.f32 %v1607, %v2251
  %v2380 = vadd.f32 %v1608, %v2252
  %v2381 = vadd.f32 %v1609, %v2253
  %v2382 = vadd.f32 %v1610, %v2254
  %v2383 = vadd.f32 %v1611, %v2255
  %v2384 = vadd.f32 %v1612, %v2256
  %v2385 = vadd.f32 %v1613, %v2257
  %v2386 = vadd.f32 %v1614, %v2258
  %v2387 = vadd.f32 %v1615, %v2259
  %v2388 = vadd.f32 %v1616, %v2260
  %v2389 = vadd.f32 %v1617, %v2261
  %v2390 = vadd.f32 %v1618, %v2262
  %v2391 = vadd.f32 %v1619, %v2263
  %v2392 = vadd.f32 %v1620, %v2264
  %v2393 = vadd.f32 %v1621, %v2265
  %v2394 = vadd.f32 %v1622, %v2266
  %v2395 = vadd.f32 %v1623, %v2267
  %v2396 = vadd.f32 %v1624, %v2268
  %v2397 = vadd.f32 %v1625, %v2269
  %v2398 = vadd.f32 %v1626, %v2270
  %v2399 = vadd.f32 %v1627, %v2271
  %v2400 = vadd.f32 %v1628, %v2272
  %v2401 = vadd.f32 %v1629, %v2273
  %v2402 = vadd.f32 %v1630, %v2274
  %v2403 = vadd.f32 %v1631, %v2275
  %v2404 = vadd.f32 %v1632, %v2276
  %v2405 = vadd.f32 %v1633, %v2277
  %v2406 = vadd.f32 %v1634, %v2278
  %v2407 = vadd.f32 %v1635, %v2279
  %v2408 = vadd.f32 %v1636, %v2280
  %v2409 = vadd.f32 %v1637, %v2281
  %v2410 = vadd.f32 %v1638, %v2282
  %v2411 = vadd.f32 %v1639, %v2283
  %v2412 = vadd.f32 %v1640, %v2284
  %v2413 = vadd.f32 %v1641, %v2285
  %v2414 = vadd.f32 %v1642, %v2286
  %v2415 = vadd.f32 %v1643, %v2287
  %v2416 = vadd.f32 %v1644, %v2288
  %v2417 = vadd.f32 %v1645, %v2289
  %v2418 = vadd.f32 %v1646, %v2290
  %v2419 = vadd.f32 %v1647, %v2291
  %v2420 = vadd.f32 %v1648, %v2292
  %v2421 = vadd.f32 %v1649, %v2293
  %v2422 = vadd.f32 %v1650, %v2294
  %v2423 = vadd.f32 %v1651, %v2295
  %v2424 = vadd.f32 %v1652, %v2296
  %v2425 = vadd.f32 %v1653, %v2297
  %v2426 = vadd.f32 %v1654, %v2298
  %v2427 = vadd.f32 %v1655, %v2299
  %v2428 = vadd.f32 %v1656, %v2300
  %v2429 = vadd.f32 %v1657, %v2301
  %v2430 = vadd.f32 %v1658, %v2302
  %v2431 = vadd.f32 %v1659, %v2303
  %v2432 = vadd.f32 %v1660, %v2304
  %v2433 = vadd.f32 %v1661, %v2305
  %v2434 = vadd.f32 %v1662, %v2306
  %v2435 = vadd.f32 %v1663, %v2307
  %v2436 = vadd.f32 %v1664, %v2308
  %v2437 = vadd.f32 %v1665, %v2309
  %v2438 = vadd.f32 %v1666, %v2310
  %v2439 = vadd.f32 %v1667, %v2311
  %v2440 = vadd.f32 %v1668, %v2312
  %v2441 = vadd.f32 %v1669, %v2313
  %v2442 = vadd.f32 %v1670, %v2314
  %v2443 = vadd.f32 %v1671, %v2315
  %v2444 = vadd.f32 %v1672, %v2316
  %v2445 = vadd.f32 %v1673, %v2317
  %v2446 = vadd.f32 %v1674, %v2318
  %v2447 = vadd.f32 %v1675, %v2319
  %v2448 = vadd.f32 %v1676, %v2320
  %v2449 = vadd.f32 %v1677, %v2321
  %v2450 = vadd.f32 %v1678, %v2322
  %v2451 = vadd.f32 %v1679, %v2323
  %v2452 = vadd.f32 %v1680, %v2324
  %v2453 = vadd.f32 %v1681, %v2325
  %v2454 = vadd.f32 %v1682, %v2326
  %v2455 = vadd.f32 %v1683, %v2327
  %2456 = vset.pattern.permute.xlu0 3
  %2457 = vperm.xlu0 %2456, %v11
  %v2458 = vpop.permute.xlu0 %2457
  %2460 = vset.pattern.permute.xlu0 3
  %2461 = vperm.xlu0 %2460, %v12
  %v2462 = vpop.permute.xlu0 %2461
  %2464 = vset.pattern.permute.xlu0 3
  %2465 = vperm.xlu0 %2464, %v13
  %v2466 = vpop.permute.xlu0 %2465
  %2468 = vset.pattern.permute.xlu0 3
  %2469 = vperm.xlu0 %2468, %v14
  %v2470 = vpop.permute.xlu0 %2469
  %2472 = vset.pattern.permute.xlu0 3
  %2473 = vperm.xlu0 %2472, %v15
  %v2474 = vpop.permute.xlu0 %2473
  %2476 = vset.pattern.permute.xlu0 3
  %2477 = vperm.xlu0 %2476, %v16
  %v2478 = vpop.permute.xlu0 %2477
  %2480 = vset.pattern.permute.xlu0 3
  %2481 = vperm.xlu0 %2480, %v17
  %v2482 = vpop.permute.xlu0 %2481
  %2484 = vset.pattern.permute.xlu0 3
  %2485 = vperm.xlu0 %2484, %v18
  %v2486 = vpop.permute.xlu0 %2485
  %2488 = vset.pattern.permute.xlu0 3
  %2489 = vperm.xlu0 %2488, %v19
  %v2490 = vpop.permute.xlu0 %2489
  %2492 = vset.pattern.permute.xlu0 3
  %2493 = vperm.xlu0 %2492, %v20
  %v2494 = vpop.permute.xlu0 %2493
  %2496 = vset.pattern.permute.xlu0 3
  %2497 = vperm.xlu0 %2496, %v21
  %v2498 = vpop.permute.xlu0 %2497
  %2500 = vset.pattern.permute.xlu0 3
  %2501 = vperm.xlu0 %2500, %v22
  %v2502 = vpop.permute.xlu0 %2501
  %2504 = vset.pattern.permute.xlu0 3
  %2505 = vperm.xlu0 %2504, %v23
  %v2506 = vpop.permute.xlu0 %2505
  %2508 = vset.pattern.permute.xlu0 3
  %2509 = vperm.xlu0 %2508, %v24
  %v2510 = vpop.permute.xlu0 %2509
  %2512 = vset.pattern.permute.xlu0 3
  %2513 = vperm.xlu0 %2512, %v25
  %v2514 = vpop.permute.xlu0 %2513
  %2516 = vset.pattern.permute.xlu0 3
  %2517 = vperm.xlu0 %2516, %v26
  %v2518 = vpop.permute.xlu0 %2517
  %2520 = vset.pattern.permute.xlu0 3
  %2521 = vperm.xlu0 %2520, %v27
  %v2522 = vpop.permute.xlu0 %2521
  %2524 = vset.pattern.permute.xlu0 3
  %2525 = vperm.xlu0 %2524, %v28
  %v2526 = vpop.permute.xlu0 %2525
  %2528 = vset.pattern.permute.xlu0 3
  %2529 = vperm.xlu0 %2528, %v29
  %v2530 = vpop.permute.xlu0 %2529
  %2532 = vset.pattern.permute.xlu0 3
  %2533 = vperm.xlu0 %2532, %v30
  %v2534 = vpop.permute.xlu0 %2533
  %2536 = vset.pattern.permute.xlu0 3
  %2537 = vperm.xlu0 %2536, %v31
  %v2538 = vpop.permute.xlu0 %2537
  %2540 = vset.pattern.permute.xlu0 3
  %2541 = vperm.xlu0 %2540, %v32
  %v2542 = vpop.permute.xlu0 %2541
  %2544 = vset.pattern.permute.xlu0 3
  %2545 = vperm.xlu0 %2544, %v33
  %v2546 = vpop.permute.xlu0 %2545
  %2548 = vset.pattern.permute.xlu0 3
  %2549 = vperm.xlu0 %2548, %v34
  %v2550 = vpop.permute.xlu0 %2549
  %2552 = vset.pattern.permute.xlu0 3
  %2553 = vperm.xlu0 %2552, %v35
  %v2554 = vpop.permute.xlu0 %2553
  %2556 = vset.pattern.permute.xlu0 3
  %2557 = vperm.xlu0 %2556, %v36
  %v2558 = vpop.permute.xlu0 %2557
  %2560 = vset.pattern.permute.xlu0 3
  %2561 = vperm.xlu0 %2560, %v37
  %v2562 = vpop.permute.xlu0 %2561
  %2564 = vset.pattern.permute.xlu0 3
  %2565 = vperm.xlu0 %2564, %v38
  %v2566 = vpop.permute.xlu0 %2565
  %2568 = vset.pattern.permute.xlu0 3
  %2569 = vperm.xlu0 %2568, %v39
  %v2570 = vpop.permute.xlu0 %2569
  %2572 = vset.pattern.permute.xlu0 3
  %2573 = vperm.xlu0 %2572, %v40
  %v2574 = vpop.permute.xlu0 %2573
  %2576 = vset.pattern.permute.xlu0 3
  %2577 = vperm.xlu0 %2576, %v41
  %v2578 = vpop.permute.xlu0 %2577
  %2580 = vset.pattern.permute.xlu0 3
  %2581 = vperm.xlu0 %2580, %v42
  %v2582 = vpop.permute.xlu0 %2581
  %2584 = vset.pattern.permute.xlu0 3
  %2585 = vperm.xlu0 %2584, %v43
  %v2586 = vpop.permute.xlu0 %2585
  %2588 = vset.pattern.permute.xlu0 3
  %2589 = vperm.xlu0 %2588, %v44
  %v2590 = vpop.permute.xlu0 %2589
  %2592 = vset.pattern.permute.xlu0 3
  %2593 = vperm.xlu0 %2592, %v45
  %v2594 = vpop.permute.xlu0 %2593
  %2596 = vset.pattern.permute.xlu0 3
  %2597 = vperm.xlu0 %2596, %v46
  %v2598 = vpop.permute.xlu0 %2597
  %2600 = vset.pattern.permute.xlu0 3
  %2601 = vperm.xlu0 %2600, %v47
  %v2602 = vpop.permute.xlu0 %2601
  %2604 = vset.pattern.permute.xlu0 3
  %2605 = vperm.xlu0 %2604, %v48
  %v2606 = vpop.permute.xlu0 %2605
  %2608 = vset.pattern.permute.xlu0 3
  %2609 = vperm.xlu0 %2608, %v49
  %v2610 = vpop.permute.xlu0 %2609
  %2612 = vset.pattern.permute.xlu0 3
  %2613 = vperm.xlu0 %2612, %v50
  %v2614 = vpop.permute.xlu0 %2613
  %2616 = vset.pattern.permute.xlu0 3
  %2617 = vperm.xlu0 %2616, %v51
  %v2618 = vpop.permute.xlu0 %2617
  %2620 = vset.pattern.permute.xlu0 3
  %2621 = vperm.xlu0 %2620, %v52
  %v2622 = vpop.permute.xlu0 %2621
  %2624 = vset.pattern.permute.xlu0 3
  %2625 = vperm.xlu0 %2624, %v53
  %v2626 = vpop.permute.xlu0 %2625
  %2628 = vset.pattern.permute.xlu0 3
  %2629 = vperm.xlu0 %2628, %v54
  %v2630 = vpop.permute.xlu0 %2629
  %2632 = vset.pattern.permute.xlu0 3
  %2633 = vperm.xlu0 %2632, %v55
  %v2634 = vpop.permute.xlu0 %2633
  %2636 = vset.pattern.permute.xlu0 3
  %2637 = vperm.xlu0 %2636, %v56
  %v2638 = vpop.permute.xlu0 %2637
  %2640 = vset.pattern.permute.xlu0 3
  %2641 = vperm.xlu0 %2640, %v57
  %v2642 = vpop.permute.xlu0 %2641
  %2644 = vset.pattern.permute.xlu0 3
  %2645 = vperm.xlu0 %2644, %v58
  %v2646 = vpop.permute.xlu0 %2645
  %2648 = vset.pattern.permute.xlu0 3
  %2649 = vperm.xlu0 %2648, %v59
  %v2650 = vpop.permute.xlu0 %2649
  %2652 = vset.pattern.permute.xlu0 3
  %2653 = vperm.xlu0 %2652, %v60
  %v2654 = vpop.permute.xlu0 %2653
  %2656 = vset.pattern.permute.xlu0 3
  %2657 = vperm.xlu0 %2656, %v61
  %v2658 = vpop.permute.xlu0 %2657
  %2660 = vset.pattern.permute.xlu0 3
  %2661 = vperm.xlu0 %2660, %v62
  %v2662 = vpop.permute.xlu0 %2661
  %2664 = vset.pattern.permute.xlu0 3
  %2665 = vperm.xlu0 %2664, %v63
  %v2666 = vpop.permute.xlu0 %2665
  %2668 = vset.pattern.permute.xlu0 3
  %2669 = vperm.xlu0 %2668, %v64
  %v2670 = vpop.permute.xlu0 %2669
  %2672 = vset.pattern.permute.xlu0 3
  %2673 = vperm.xlu0 %2672, %v65
  %v2674 = vpop.permute.xlu0 %2673
  %2676 = vset.pattern.permute.xlu0 3
  %2677 = vperm.xlu0 %2676, %v66
  %v2678 = vpop.permute.xlu0 %2677
  %2680 = vset.pattern.permute.xlu0 3
  %2681 = vperm.xlu0 %2680, %v67
  %v2682 = vpop.permute.xlu0 %2681
  %2684 = vset.pattern.permute.xlu0 3
  %2685 = vperm.xlu0 %2684, %v68
  %v2686 = vpop.permute.xlu0 %2685
  %2688 = vset.pattern.permute.xlu0 3
  %2689 = vperm.xlu0 %2688, %v69
  %v2690 = vpop.permute.xlu0 %2689
  %2692 = vset.pattern.permute.xlu0 3
  %2693 = vperm.xlu0 %2692, %v70
  %v2694 = vpop.permute.xlu0 %2693
  %2696 = vset.pattern.permute.xlu0 3
  %2697 = vperm.xlu0 %2696, %v71
  %v2698 = vpop.permute.xlu0 %2697
  %2700 = vset.pattern.permute.xlu0 3
  %2701 = vperm.xlu0 %2700, %v72
  %v2702 = vpop.permute.xlu0 %2701
  %2704 = vset.pattern.permute.xlu0 3
  %2705 = vperm.xlu0 %2704, %v73
  %v2706 = vpop.permute.xlu0 %2705
  %2708 = vset.pattern.permute.xlu0 3
  %2709 = vperm.xlu0 %2708, %v74
  %v2710 = vpop.permute.xlu0 %2709
  %2712 = vset.pattern.permute.xlu0 3
  %2713 = vperm.xlu0 %2712, %v75
  %v2714 = vpop.permute.xlu0 %2713
  %2716 = vset.pattern.permute.xlu0 3
  %2717 = vperm.xlu0 %2716, %v76
  %v2718 = vpop.permute.xlu0 %2717
  %2720 = vset.pattern.permute.xlu0 3
  %2721 = vperm.xlu0 %2720, %v77
  %v2722 = vpop.permute.xlu0 %2721
  %2724 = vset.pattern.permute.xlu0 3
  %2725 = vperm.xlu0 %2724, %v78
  %v2726 = vpop.permute.xlu0 %2725
  %2728 = vset.pattern.permute.xlu0 3
  %2729 = vperm.xlu0 %2728, %v79
  %v2730 = vpop.permute.xlu0 %2729
  %2732 = vset.pattern.permute.xlu0 3
  %2733 = vperm.xlu0 %2732, %v80
  %v2734 = vpop.permute.xlu0 %2733
  %2736 = vset.pattern.permute.xlu0 3
  %2737 = vperm.xlu0 %2736, %v81
  %v2738 = vpop.permute.xlu0 %2737
  %2740 = vset.pattern.permute.xlu0 3
  %2741 = vperm.xlu0 %2740, %v82
  %v2742 = vpop.permute.xlu0 %2741
  %2744 = vset.pattern.permute.xlu0 3
  %2745 = vperm.xlu0 %2744, %v83
  %v2746 = vpop.permute.xlu0 %2745
  %2748 = vset.pattern.permute.xlu0 3
  %2749 = vperm.xlu0 %2748, %v84
  %v2750 = vpop.permute.xlu0 %2749
  %2752 = vset.pattern.permute.xlu0 3
  %2753 = vperm.xlu0 %2752, %v85
  %v2754 = vpop.permute.xlu0 %2753
  %2756 = vset.pattern.permute.xlu0 3
  %2757 = vperm.xlu0 %2756, %v86
  %v2758 = vpop.permute.xlu0 %2757
  %2760 = vset.pattern.permute.xlu0 3
  %2761 = vperm.xlu0 %2760, %v87
  %v2762 = vpop.permute.xlu0 %2761
  %2764 = vset.pattern.permute.xlu0 3
  %2765 = vperm.xlu0 %2764, %v88
  %v2766 = vpop.permute.xlu0 %2765
  %2768 = vset.pattern.permute.xlu0 3
  %2769 = vperm.xlu0 %2768, %v89
  %v2770 = vpop.permute.xlu0 %2769
  %2772 = vset.pattern.permute.xlu0 3
  %2773 = vperm.xlu0 %2772, %v90
  %v2774 = vpop.permute.xlu0 %2773
  %2776 = vset.pattern.permute.xlu0 3
  %2777 = vperm.xlu0 %2776, %v91
  %v2778 = vpop.permute.xlu0 %2777
  %2780 = vset.pattern.permute.xlu0 3
  %2781 = vperm.xlu0 %2780, %v92
  %v2782 = vpop.permute.xlu0 %2781
  %2784 = vset.pattern.permute.xlu0 3
  %2785 = vperm.xlu0 %2784, %v93
  %v2786 = vpop.permute.xlu0 %2785
  %2788 = vset.pattern.permute.xlu0 3
  %2789 = vperm.xlu0 %2788, %v94
  %v2790 = vpop.permute.xlu0 %2789
  %2792 = vset.pattern.permute.xlu0 3
  %2793 = vperm.xlu0 %2792, %v95
  %v2794 = vpop.permute.xlu0 %2793
  %2796 = vset.pattern.permute.xlu0 3
  %2797 = vperm.xlu0 %2796, %v96
  %v2798 = vpop.permute.xlu0 %2797
  %2800 = vset.pattern.permute.xlu0 3
  %2801 = vperm.xlu0 %2800, %v97
  %v2802 = vpop.permute.xlu0 %2801
  %2804 = vset.pattern.permute.xlu0 3
  %2805 = vperm.xlu0 %2804, %v98
  %v2806 = vpop.permute.xlu0 %2805
  %2808 = vset.pattern.permute.xlu0 3
  %2809 = vperm.xlu0 %2808, %v99
  %v2810 = vpop.permute.xlu0 %2809
  %2812 = vset.pattern.permute.xlu0 3
  %2813 = vperm.xlu0 %2812, %v100
  %v2814 = vpop.permute.xlu0 %2813
  %2816 = vset.pattern.permute.xlu0 3
  %2817 = vperm.xlu0 %2816, %v101
  %v2818 = vpop.permute.xlu0 %2817
  %2820 = vset.pattern.permute.xlu0 3
  %2821 = vperm.xlu0 %2820, %v102
  %v2822 = vpop.permute.xlu0 %2821
  %2824 = vset.pattern.permute.xlu0 3
  %2825 = vperm.xlu0 %2824, %v103
  %v2826 = vpop.permute.xlu0 %2825
  %2828 = vset.pattern.permute.xlu0 3
  %2829 = vperm.xlu0 %2828, %v104
  %v2830 = vpop.permute.xlu0 %2829
  %2832 = vset.pattern.permute.xlu0 3
  %2833 = vperm.xlu0 %2832, %v105
  %v2834 = vpop.permute.xlu0 %2833
  %2836 = vset.pattern.permute.xlu0 3
  %2837 = vperm.xlu0 %2836, %v106
  %v2838 = vpop.permute.xlu0 %2837
  %2840 = vset.pattern.permute.xlu0 3
  %2841 = vperm.xlu0 %2840, %v107
  %v2842 = vpop.permute.xlu0 %2841
  %2844 = vset.pattern.permute.xlu0 3
  %2845 = vperm.xlu0 %2844, %v108
  %v2846 = vpop.permute.xlu0 %2845
  %2848 = vset.pattern.permute.xlu0 3
  %2849 = vperm.xlu0 %2848, %v109
  %v2850 = vpop.permute.xlu0 %2849
  %2852 = vset.pattern.permute.xlu0 3
  %2853 = vperm.xlu0 %2852, %v110
  %v2854 = vpop.permute.xlu0 %2853
  %2856 = vset.pattern.permute.xlu0 3
  %2857 = vperm.xlu0 %2856, %v111
  %v2858 = vpop.permute.xlu0 %2857
  %2860 = vset.pattern.permute.xlu0 3
  %2861 = vperm.xlu0 %2860, %v112
  %v2862 = vpop.permute.xlu0 %2861
  %2864 = vset.pattern.permute.xlu0 3
  %2865 = vperm.xlu0 %2864, %v113
  %v2866 = vpop.permute.xlu0 %2865
  %2868 = vset.pattern.permute.xlu0 3
  %2869 = vperm.xlu0 %2868, %v114
  %v2870 = vpop.permute.xlu0 %2869
  %2872 = vset.pattern.permute.xlu0 3
  %2873 = vperm.xlu0 %2872, %v115
  %v2874 = vpop.permute.xlu0 %2873
  %2876 = vset.pattern.permute.xlu0 3
  %2877 = vperm.xlu0 %2876, %v116
  %v2878 = vpop.permute.xlu0 %2877
  %2880 = vset.pattern.permute.xlu0 3
  %2881 = vperm.xlu0 %2880, %v117
  %v2882 = vpop.permute.xlu0 %2881
  %2884 = vset.pattern.permute.xlu0 3
  %2885 = vperm.xlu0 %2884, %v118
  %v2886 = vpop.permute.xlu0 %2885
  %2888 = vset.pattern.permute.xlu0 3
  %2889 = vperm.xlu0 %2888, %v119
  %v2890 = vpop.permute.xlu0 %2889
  %2892 = vset.pattern.permute.xlu0 3
  %2893 = vperm.xlu0 %2892, %v120
  %v2894 = vpop.permute.xlu0 %2893
  %2896 = vset.pattern.permute.xlu0 3
  %2897 = vperm.xlu0 %2896, %v121
  %v2898 = vpop.permute.xlu0 %2897
  %2900 = vset.pattern.permute.xlu0 3
  %2901 = vperm.xlu0 %2900, %v122
  %v2902 = vpop.permute.xlu0 %2901
  %2904 = vset.pattern.permute.xlu0 3
  %2905 = vperm.xlu0 %2904, %v123
  %v2906 = vpop.permute.xlu0 %2905
  %2908 = vset.pattern.permute.xlu0 3
  %2909 = vperm.xlu0 %2908, %v124
  %v2910 = vpop.permute.xlu0 %2909
  %2912 = vset.pattern.permute.xlu0 3
  %2913 = vperm.xlu0 %2912, %v125
  %v2914 = vpop.permute.xlu0 %2913
  %2916 = vset.pattern.permute.xlu0 3
  %2917 = vperm.xlu0 %2916, %v126
  %v2918 = vpop.permute.xlu0 %2917
  %2920 = vset.pattern.permute.xlu0 3
  %2921 = vperm.xlu0 %2920, %v127
  %v2922 = vpop.permute.xlu0 %2921
  %2924 = vset.pattern.permute.xlu0 3
  %2925 = vperm.xlu0 %2924, %v128
  %v2926 = vpop.permute.xlu0 %2925
  %2928 = vset.pattern.permute.xlu0 3
  %2929 = vperm.xlu0 %2928, %v129
  %v2930 = vpop.permute.xlu0 %2929
  %2932 = vset.pattern.permute.xlu0 3
  %2933 = vperm.xlu0 %2932, %v130
  %v2934 = vpop.permute.xlu0 %2933
  %2936 = vset.pattern.permute.xlu0 3
  %2937 = vperm.xlu0 %2936, %v131
  %v2938 = vpop.permute.xlu0 %2937
  %2940 = vset.pattern.permute.xlu0 3
  %2941 = vperm.xlu0 %2940, %v132
  %v2942 = vpop.permute.xlu0 %2941
  %2944 = vset.pattern.permute.xlu0 3
  %2945 = vperm.xlu0 %2944, %v133
  %v2946 = vpop.permute.xlu0 %2945
  %2948 = vset.pattern.permute.xlu0 3
  %2949 = vperm.xlu0 %2948, %v134
  %v2950 = vpop.permute.xlu0 %2949
  %2952 = vset.pattern.permute.xlu0 3
  %2953 = vperm.xlu0 %2952, %v135
  %v2954 = vpop.permute.xlu0 %2953
  %2956 = vset.pattern.permute.xlu0 3
  %2957 = vperm.xlu0 %2956, %v136
  %v2958 = vpop.permute.xlu0 %2957
  %2960 = vset.pattern.permute.xlu0 3
  %2961 = vperm.xlu0 %2960, %v137
  %v2962 = vpop.permute.xlu0 %2961
  %2964 = vset.pattern.permute.xlu0 3
  %2965 = vperm.xlu0 %2964, %v138
  %v2966 = vpop.permute.xlu0 %2965
  %v2968 = vlaneseq
  %v2969 = vshrl.u32 %v2968, 7
  %v2970 = vsub.s32 3, %v2969
  %v2971 = vrot.slane %v139, %v2970
  %v2972 = vmul.f32 %v2458, %v2971
  %v2973 = vmul.f32 %v2462, %v2971
  %v2974 = vmul.f32 %v2466, %v2971
  %v2975 = vmul.f32 %v2470, %v2971
  %v2976 = vmul.f32 %v2474, %v2971
  %v2977 = vmul.f32 %v2478, %v2971
  %v2978 = vmul.f32 %v2482, %v2971
  %v2979 = vmul.f32 %v2486, %v2971
  %v2980 = vmul.f32 %v2490, %v2971
  %v2981 = vmul.f32 %v2494, %v2971
  %v2982 = vmul.f32 %v2498, %v2971
  %v2983 = vmul.f32 %v2502, %v2971
  %v2984 = vmul.f32 %v2506, %v2971
  %v2985 = vmul.f32 %v2510, %v2971
  %v2986 = vmul.f32 %v2514, %v2971
  %v2987 = vmul.f32 %v2518, %v2971
  %v2988 = vmul.f32 %v2522, %v2971
  %v2989 = vmul.f32 %v2526, %v2971
  %v2990 = vmul.f32 %v2530, %v2971
  %v2991 = vmul.f32 %v2534, %v2971
  %v2992 = vmul.f32 %v2538, %v2971
  %v2993 = vmul.f32 %v2542, %v2971
  %v2994 = vmul.f32 %v2546, %v2971
  %v2995 = vmul.f32 %v2550, %v2971
  %v2996 = vmul.f32 %v2554, %v2971
  %v2997 = vmul.f32 %v2558, %v2971
  %v2998 = vmul.f32 %v2562, %v2971
  %v2999 = vmul.f32 %v2566, %v2971
  %v3000 = vmul.f32 %v2570, %v2971
  %v3001 = vmul.f32 %v2574, %v2971
  %v3002 = vmul.f32 %v2578, %v2971
  %v3003 = vmul.f32 %v2582, %v2971
  %v3004 = vmul.f32 %v2586, %v2971
  %v3005 = vmul.f32 %v2590, %v2971
  %v3006 = vmul.f32 %v2594, %v2971
  %v3007 = vmul.f32 %v2598, %v2971
  %v3008 = vmul.f32 %v2602, %v2971
  %v3009 = vmul.f32 %v2606, %v2971
  %v3010 = vmul.f32 %v2610, %v2971
  %v3011 = vmul.f32 %v2614, %v2971
  %v3012 = vmul.f32 %v2618, %v2971
  %v3013 = vmul.f32 %v2622, %v2971
  %v3014 = vmul.f32 %v2626, %v2971
  %v3015 = vmul.f32 %v2630, %v2971
  %v3016 = vmul.f32 %v2634, %v2971
  %v3017 = vmul.f32 %v2638, %v2971
  %v3018 = vmul.f32 %v2642, %v2971
  %v3019 = vmul.f32 %v2646, %v2971
  %v3020 = vmul.f32 %v2650, %v2971
  %v3021 = vmul.f32 %v2654, %v2971
  %v3022 = vmul.f32 %v2658, %v2971
  %v3023 = vmul.f32 %v2662, %v2971
  %v3024 = vmul.f32 %v2666, %v2971
  %v3025 = vmul.f32 %v2670, %v2971
  %v3026 = vmul.f32 %v2674, %v2971
  %v3027 = vmul.f32 %v2678, %v2971
  %v3028 = vmul.f32 %v2682, %v2971
  %v3029 = vmul.f32 %v2686, %v2971
  %v3030 = vmul.f32 %v2690, %v2971
  %v3031 = vmul.f32 %v2694, %v2971
  %v3032 = vmul.f32 %v2698, %v2971
  %v3033 = vmul.f32 %v2702, %v2971
  %v3034 = vmul.f32 %v2706, %v2971
  %v3035 = vmul.f32 %v2710, %v2971
  %v3036 = vmul.f32 %v2714, %v2971
  %v3037 = vmul.f32 %v2718, %v2971
  %v3038 = vmul.f32 %v2722, %v2971
  %v3039 = vmul.f32 %v2726, %v2971
  %v3040 = vmul.f32 %v2730, %v2971
  %v3041 = vmul.f32 %v2734, %v2971
  %v3042 = vmul.f32 %v2738, %v2971
  %v3043 = vmul.f32 %v2742, %v2971
  %v3044 = vmul.f32 %v2746, %v2971
  %v3045 = vmul.f32 %v2750, %v2971
  %v3046 = vmul.f32 %v2754, %v2971
  %v3047 = vmul.f32 %v2758, %v2971
  %v3048 = vmul.f32 %v2762, %v2971
  %v3049 = vmul.f32 %v2766, %v2971
  %v3050 = vmul.f32 %v2770, %v2971
  %v3051 = vmul.f32 %v2774, %v2971
  %v3052 = vmul.f32 %v2778, %v2971
  %v3053 = vmul.f32 %v2782, %v2971
  %v3054 = vmul.f32 %v2786, %v2971
  %v3055 = vmul.f32 %v2790, %v2971
  %v3056 = vmul.f32 %v2794, %v2971
  %v3057 = vmul.f32 %v2798, %v2971
  %v3058 = vmul.f32 %v2802, %v2971
  %v3059 = vmul.f32 %v2806, %v2971
  %v3060 = vmul.f32 %v2810, %v2971
  %v3061 = vmul.f32 %v2814, %v2971
  %v3062 = vmul.f32 %v2818, %v2971
  %v3063 = vmul.f32 %v2822, %v2971
  %v3064 = vmul.f32 %v2826, %v2971
  %v3065 = vmul.f32 %v2830, %v2971
  %v3066 = vmul.f32 %v2834, %v2971
  %v3067 = vmul.f32 %v2838, %v2971
  %v3068 = vmul.f32 %v2842, %v2971
  %v3069 = vmul.f32 %v2846, %v2971
  %v3070 = vmul.f32 %v2850, %v2971
  %v3071 = vmul.f32 %v2854, %v2971
  %v3072 = vmul.f32 %v2858, %v2971
  %v3073 = vmul.f32 %v2862, %v2971
  %v3074 = vmul.f32 %v2866, %v2971
  %v3075 = vmul.f32 %v2870, %v2971
  %v3076 = vmul.f32 %v2874, %v2971
  %v3077 = vmul.f32 %v2878, %v2971
  %v3078 = vmul.f32 %v2882, %v2971
  %v3079 = vmul.f32 %v2886, %v2971
  %v3080 = vmul.f32 %v2890, %v2971
  %v3081 = vmul.f32 %v2894, %v2971
  %v3082 = vmul.f32 %v2898, %v2971
  %v3083 = vmul.f32 %v2902, %v2971
  %v3084 = vmul.f32 %v2906, %v2971
  %v3085 = vmul.f32 %v2910, %v2971
  %v3086 = vmul.f32 %v2914, %v2971
  %v3087 = vmul.f32 %v2918, %v2971
  %v3088 = vmul.f32 %v2922, %v2971
  %v3089 = vmul.f32 %v2926, %v2971
  %v3090 = vmul.f32 %v2930, %v2971
  %v3091 = vmul.f32 %v2934, %v2971
  %v3092 = vmul.f32 %v2938, %v2971
  %v3093 = vmul.f32 %v2942, %v2971
  %v3094 = vmul.f32 %v2946, %v2971
  %v3095 = vmul.f32 %v2950, %v2971
  %v3096 = vmul.f32 %v2954, %v2971
  %v3097 = vmul.f32 %v2958, %v2971
  %v3098 = vmul.f32 %v2962, %v2971
  %v3099 = vmul.f32 %v2966, %v2971
  %v3100 = vadd.f32 %v2328, %v2972
  %v3101 = vadd.f32 %v2329, %v2973
  %v3102 = vadd.f32 %v2330, %v2974
  %v3103 = vadd.f32 %v2331, %v2975
  %v3104 = vadd.f32 %v2332, %v2976
  %v3105 = vadd.f32 %v2333, %v2977
  %v3106 = vadd.f32 %v2334, %v2978
  %v3107 = vadd.f32 %v2335, %v2979
  %v3108 = vadd.f32 %v2336, %v2980
  %v3109 = vadd.f32 %v2337, %v2981
  %v3110 = vadd.f32 %v2338, %v2982
  %v3111 = vadd.f32 %v2339, %v2983
  %v3112 = vadd.f32 %v2340, %v2984
  %v3113 = vadd.f32 %v2341, %v2985
  %v3114 = vadd.f32 %v2342, %v2986
  %v3115 = vadd.f32 %v2343, %v2987
  %v3116 = vadd.f32 %v2344, %v2988
  %v3117 = vadd.f32 %v2345, %v2989
  %v3118 = vadd.f32 %v2346, %v2990
  %v3119 = vadd.f32 %v2347, %v2991
  %v3120 = vadd.f32 %v2348, %v2992
  %v3121 = vadd.f32 %v2349, %v2993
  %v3122 = vadd.f32 %v2350, %v2994
  %v3123 = vadd.f32 %v2351, %v2995
  %v3124 = vadd.f32 %v2352, %v2996
  %v3125 = vadd.f32 %v2353, %v2997
  %v3126 = vadd.f32 %v2354, %v2998
  %v3127 = vadd.f32 %v2355, %v2999
  %v3128 = vadd.f32 %v2356, %v3000
  %v3129 = vadd.f32 %v2357, %v3001
  %v3130 = vadd.f32 %v2358, %v3002
  %v3131 = vadd.f32 %v2359, %v3003
  %v3132 = vadd.f32 %v2360, %v3004
  %v3133 = vadd.f32 %v2361, %v3005
  %v3134 = vadd.f32 %v2362, %v3006
  %v3135 = vadd.f32 %v2363, %v3007
  %v3136 = vadd.f32 %v2364, %v3008
  %v3137 = vadd.f32 %v2365, %v3009
  %v3138 = vadd.f32 %v2366, %v3010
  %v3139 = vadd.f32 %v2367, %v3011
  %v3140 = vadd.f32 %v2368, %v3012
  %v3141 = vadd.f32 %v2369, %v3013
  %v3142 = vadd.f32 %v2370, %v3014
  %v3143 = vadd.f32 %v2371, %v3015
  %v3144 = vadd.f32 %v2372, %v3016
  %v3145 = vadd.f32 %v2373, %v3017
  %v3146 = vadd.f32 %v2374, %v3018
  %v3147 = vadd.f32 %v2375, %v3019
  %v3148 = vadd.f32 %v2376, %v3020
  %v3149 = vadd.f32 %v2377, %v3021
  %v3150 = vadd.f32 %v2378, %v3022
  %v3151 = vadd.f32 %v2379, %v3023
  %v3152 = vadd.f32 %v2380, %v3024
  %v3153 = vadd.f32 %v2381, %v3025
  %v3154 = vadd.f32 %v2382, %v3026
  %v3155 = vadd.f32 %v2383, %v3027
  %v3156 = vadd.f32 %v2384, %v3028
  %v3157 = vadd.f32 %v2385, %v3029
  %v3158 = vadd.f32 %v2386, %v3030
  %v3159 = vadd.f32 %v2387, %v3031
  %v3160 = vadd.f32 %v2388, %v3032
  %v3161 = vadd.f32 %v2389, %v3033
  %v3162 = vadd.f32 %v2390, %v3034
  %v3163 = vadd.f32 %v2391, %v3035
  %v3164 = vadd.f32 %v2392, %v3036
  %v3165 = vadd.f32 %v2393, %v3037
  %v3166 = vadd.f32 %v2394, %v3038
  %v3167 = vadd.f32 %v2395, %v3039
  %v3168 = vadd.f32 %v2396, %v3040
  %v3169 = vadd.f32 %v2397, %v3041
  %v3170 = vadd.f32 %v2398, %v3042
  %v3171 = vadd.f32 %v2399, %v3043
  %v3172 = vadd.f32 %v2400, %v3044
  %v3173 = vadd.f32 %v2401, %v3045
  %v3174 = vadd.f32 %v2402, %v3046
  %v3175 = vadd.f32 %v2403, %v3047
  %v3176 = vadd.f32 %v2404, %v3048
  %v3177 = vadd.f32 %v2405, %v3049
  %v3178 = vadd.f32 %v2406, %v3050
  %v3179 = vadd.f32 %v2407, %v3051
  %v3180 = vadd.f32 %v2408, %v3052
  %v3181 = vadd.f32 %v2409, %v3053
  %v3182 = vadd.f32 %v2410, %v3054
  %v3183 = vadd.f32 %v2411, %v3055
  %v3184 = vadd.f32 %v2412, %v3056
  %v3185 = vadd.f32 %v2413, %v3057
  %v3186 = vadd.f32 %v2414, %v3058
  %v3187 = vadd.f32 %v2415, %v3059
  %v3188 = vadd.f32 %v2416, %v3060
  %v3189 = vadd.f32 %v2417, %v3061
  %v3190 = vadd.f32 %v2418, %v3062
  %v3191 = vadd.f32 %v2419, %v3063
  %v3192 = vadd.f32 %v2420, %v3064
  %v3193 = vadd.f32 %v2421, %v3065
  %v3194 = vadd.f32 %v2422, %v3066
  %v3195 = vadd.f32 %v2423, %v3067
  %v3196 = vadd.f32 %v2424, %v3068
  %v3197 = vadd.f32 %v2425, %v3069
  %v3198 = vadd.f32 %v2426, %v3070
  %v3199 = vadd.f32 %v2427, %v3071
  %v3200 = vadd.f32 %v2428, %v3072
  %v3201 = vadd.f32 %v2429, %v3073
  %v3202 = vadd.f32 %v2430, %v3074
  %v3203 = vadd.f32 %v2431, %v3075
  %v3204 = vadd.f32 %v2432, %v3076
  %v3205 = vadd.f32 %v2433, %v3077
  %v3206 = vadd.f32 %v2434, %v3078
  %v3207 = vadd.f32 %v2435, %v3079
  %v3208 = vadd.f32 %v2436, %v3080
  %v3209 = vadd.f32 %v2437, %v3081
  %v3210 = vadd.f32 %v2438, %v3082
  %v3211 = vadd.f32 %v2439, %v3083
  %v3212 = vadd.f32 %v2440, %v3084
  %v3213 = vadd.f32 %v2441, %v3085
  %v3214 = vadd.f32 %v2442, %v3086
  %v3215 = vadd.f32 %v2443, %v3087
  %v3216 = vadd.f32 %v2444, %v3088
  %v3217 = vadd.f32 %v2445, %v3089
  %v3218 = vadd.f32 %v2446, %v3090
  %v3219 = vadd.f32 %v2447, %v3091
  %v3220 = vadd.f32 %v2448, %v3092
  %v3221 = vadd.f32 %v2449, %v3093
  %v3222 = vadd.f32 %v2450, %v3094
  %v3223 = vadd.f32 %v2451, %v3095
  %v3224 = vadd.f32 %v2452, %v3096
  %v3225 = vadd.f32 %v2453, %v3097
  %v3226 = vadd.f32 %v2454, %v3098
  %v3227 = vadd.f32 %v2455, %v3099
  %vm3228 = vcmask 31744
  %3229 = vst.msk [vmem:[%s2] sm:$0xff] %vm3228, %v3100
  %3230 = vst.msk [vmem:[%s2 + $0x8] sm:$0xff] %vm3228, %v3101
  %3231 = vst.msk [vmem:[%s2 + $0x10] sm:$0xff] %vm3228, %v3102
  %3232 = vst.msk [vmem:[%s2 + $0x18] sm:$0xff] %vm3228, %v3103
  %3233 = vst.msk [vmem:[%s2 + $0x20] sm:$0xff] %vm3228, %v3104
  %3234 = vst.msk [vmem:[%s2 + $0x28] sm:$0xff] %vm3228, %v3105
  %3235 = vst.msk [vmem:[%s2 + $0x30] sm:$0xff] %vm3228, %v3106
  %3236 = vst.msk [vmem:[%s2 + $0x38] sm:$0xff] %vm3228, %v3107
  %3237 = vst.msk [vmem:[%s2 + $0x40] sm:$0xff] %vm3228, %v3108
  %3238 = vst.msk [vmem:[%s2 + $0x48] sm:$0xff] %vm3228, %v3109
  %3239 = vst.msk [vmem:[%s2 + $0x50] sm:$0xff] %vm3228, %v3110
  %3240 = vst.msk [vmem:[%s2 + $0x58] sm:$0xff] %vm3228, %v3111
  %3241 = vst.msk [vmem:[%s2 + $0x60] sm:$0xff] %vm3228, %v3112
  %3242 = vst.msk [vmem:[%s2 + $0x68] sm:$0xff] %vm3228, %v3113
  %3243 = vst.msk [vmem:[%s2 + $0x70] sm:$0xff] %vm3228, %v3114
  %3244 = vst.msk [vmem:[%s2 + $0x78] sm:$0xff] %vm3228, %v3115
  %3245 = vst.msk [vmem:[%s2 + $0x80] sm:$0xff] %vm3228, %v3116
  %3246 = vst.msk [vmem:[%s2 + $0x88] sm:$0xff] %vm3228, %v3117
  %3247 = vst.msk [vmem:[%s2 + $0x90] sm:$0xff] %vm3228, %v3118
  %3248 = vst.msk [vmem:[%s2 + $0x98] sm:$0xff] %vm3228, %v3119
  %3249 = vst.msk [vmem:[%s2 + $0xa0] sm:$0xff] %vm3228, %v3120
  %3250 = vst.msk [vmem:[%s2 + $0xa8] sm:$0xff] %vm3228, %v3121
  %3251 = vst.msk [vmem:[%s2 + $0xb0] sm:$0xff] %vm3228, %v3122
  %3252 = vst.msk [vmem:[%s2 + $0xb8] sm:$0xff] %vm3228, %v3123
  %3253 = vst.msk [vmem:[%s2 + $0xc0] sm:$0xff] %vm3228, %v3124
  %3254 = vst.msk [vmem:[%s2 + $0xc8] sm:$0xff] %vm3228, %v3125
  %3255 = vst.msk [vmem:[%s2 + $0xd0] sm:$0xff] %vm3228, %v3126
  %3256 = vst.msk [vmem:[%s2 + $0xd8] sm:$0xff] %vm3228, %v3127
  %3257 = vst.msk [vmem:[%s2 + $0xe0] sm:$0xff] %vm3228, %v3128
  %3258 = vst.msk [vmem:[%s2 + $0xe8] sm:$0xff] %vm3228, %v3129
  %3259 = vst.msk [vmem:[%s2 + $0xf0] sm:$0xff] %vm3228, %v3130
  %3260 = vst.msk [vmem:[%s2 + $0xf8] sm:$0xff] %vm3228, %v3131
  %3261 = vst.msk [vmem:[%s2 + $0x100] sm:$0xff] %vm3228, %v3132
  %3262 = vst.msk [vmem:[%s2 + $0x108] sm:$0xff] %vm3228, %v3133
  %3263 = vst.msk [vmem:[%s2 + $0x110] sm:$0xff] %vm3228, %v3134
  %3264 = vst.msk [vmem:[%s2 + $0x118] sm:$0xff] %vm3228, %v3135
  %3265 = vst.msk [vmem:[%s2 + $0x120] sm:$0xff] %vm3228, %v3136
  %3266 = vst.msk [vmem:[%s2 + $0x128] sm:$0xff] %vm3228, %v3137
  %3267 = vst.msk [vmem:[%s2 + $0x130] sm:$0xff] %vm3228, %v3138
  %3268 = vst.msk [vmem:[%s2 + $0x138] sm:$0xff] %vm3228, %v3139
  %3269 = vst.msk [vmem:[%s2 + $0x140] sm:$0xff] %vm3228, %v3140
  %3270 = vst.msk [vmem:[%s2 + $0x148] sm:$0xff] %vm3228, %v3141
  %3271 = vst.msk [vmem:[%s2 + $0x150] sm:$0xff] %vm3228, %v3142
  %3272 = vst.msk [vmem:[%s2 + $0x158] sm:$0xff] %vm3228, %v3143
  %3273 = vst.msk [vmem:[%s2 + $0x160] sm:$0xff] %vm3228, %v3144
  %3274 = vst.msk [vmem:[%s2 + $0x168] sm:$0xff] %vm3228, %v3145
  %3275 = vst.msk [vmem:[%s2 + $0x170] sm:$0xff] %vm3228, %v3146
  %3276 = vst.msk [vmem:[%s2 + $0x178] sm:$0xff] %vm3228, %v3147
  %3277 = vst.msk [vmem:[%s2 + $0x180] sm:$0xff] %vm3228, %v3148
  %3278 = vst.msk [vmem:[%s2 + $0x188] sm:$0xff] %vm3228, %v3149
  %3279 = vst.msk [vmem:[%s2 + $0x190] sm:$0xff] %vm3228, %v3150
  %3280 = vst.msk [vmem:[%s2 + $0x198] sm:$0xff] %vm3228, %v3151
  %3281 = vst.msk [vmem:[%s2 + $0x1a0] sm:$0xff] %vm3228, %v3152
  %3282 = vst.msk [vmem:[%s2 + $0x1a8] sm:$0xff] %vm3228, %v3153
  %3283 = vst.msk [vmem:[%s2 + $0x1b0] sm:$0xff] %vm3228, %v3154
  %3284 = vst.msk [vmem:[%s2 + $0x1b8] sm:$0xff] %vm3228, %v3155
  %3285 = vst.msk [vmem:[%s2 + $0x1c0] sm:$0xff] %vm3228, %v3156
  %3286 = vst.msk [vmem:[%s2 + $0x1c8] sm:$0xff] %vm3228, %v3157
  %3287 = vst.msk [vmem:[%s2 + $0x1d0] sm:$0xff] %vm3228, %v3158
  %3288 = vst.msk [vmem:[%s2 + $0x1d8] sm:$0xff] %vm3228, %v3159
  %3289 = vst.msk [vmem:[%s2 + $0x1e0] sm:$0xff] %vm3228, %v3160
  %3290 = vst.msk [vmem:[%s2 + $0x1e8] sm:$0xff] %vm3228, %v3161
  %3291 = vst.msk [vmem:[%s2 + $0x1f0] sm:$0xff] %vm3228, %v3162
  %3292 = vst.msk [vmem:[%s2 + $0x1f8] sm:$0xff] %vm3228, %v3163
  %3293 = vst.msk [vmem:[%s2 + $0x200] sm:$0xff] %vm3228, %v3164
  %3294 = vst.msk [vmem:[%s2 + $0x208] sm:$0xff] %vm3228, %v3165
  %3295 = vst.msk [vmem:[%s2 + $0x210] sm:$0xff] %vm3228, %v3166
  %3296 = vst.msk [vmem:[%s2 + $0x218] sm:$0xff] %vm3228, %v3167
  %3297 = vst.msk [vmem:[%s2 + $0x220] sm:$0xff] %vm3228, %v3168
  %3298 = vst.msk [vmem:[%s2 + $0x228] sm:$0xff] %vm3228, %v3169
  %3299 = vst.msk [vmem:[%s2 + $0x230] sm:$0xff] %vm3228, %v3170
  %3300 = vst.msk [vmem:[%s2 + $0x238] sm:$0xff] %vm3228, %v3171
  %3301 = vst.msk [vmem:[%s2 + $0x240] sm:$0xff] %vm3228, %v3172
  %3302 = vst.msk [vmem:[%s2 + $0x248] sm:$0xff] %vm3228, %v3173
  %3303 = vst.msk [vmem:[%s2 + $0x250] sm:$0xff] %vm3228, %v3174
  %3304 = vst.msk [vmem:[%s2 + $0x258] sm:$0xff] %vm3228, %v3175
  %3305 = vst.msk [vmem:[%s2 + $0x260] sm:$0xff] %vm3228, %v3176
  %3306 = vst.msk [vmem:[%s2 + $0x268] sm:$0xff] %vm3228, %v3177
  %3307 = vst.msk [vmem:[%s2 + $0x270] sm:$0xff] %vm3228, %v3178
  %3308 = vst.msk [vmem:[%s2 + $0x278] sm:$0xff] %vm3228, %v3179
  %3309 = vst.msk [vmem:[%s2 + $0x280] sm:$0xff] %vm3228, %v3180
  %3310 = vst.msk [vmem:[%s2 + $0x288] sm:$0xff] %vm3228, %v3181
  %3311 = vst.msk [vmem:[%s2 + $0x290] sm:$0xff] %vm3228, %v3182
  %3312 = vst.msk [vmem:[%s2 + $0x298] sm:$0xff] %vm3228, %v3183
  %3313 = vst.msk [vmem:[%s2 + $0x2a0] sm:$0xff] %vm3228, %v3184
  %3314 = vst.msk [vmem:[%s2 + $0x2a8] sm:$0xff] %vm3228, %v3185
  %3315 = vst.msk [vmem:[%s2 + $0x2b0] sm:$0xff] %vm3228, %v3186
  %3316 = vst.msk [vmem:[%s2 + $0x2b8] sm:$0xff] %vm3228, %v3187
  %3317 = vst.msk [vmem:[%s2 + $0x2c0] sm:$0xff] %vm3228, %v3188
  %3318 = vst.msk [vmem:[%s2 + $0x2c8] sm:$0xff] %vm3228, %v3189
  %3319 = vst.msk [vmem:[%s2 + $0x2d0] sm:$0xff] %vm3228, %v3190
  %3320 = vst.msk [vmem:[%s2 + $0x2d8] sm:$0xff] %vm3228, %v3191
  %3321 = vst.msk [vmem:[%s2 + $0x2e0] sm:$0xff] %vm3228, %v3192
  %3322 = vst.msk [vmem:[%s2 + $0x2e8] sm:$0xff] %vm3228, %v3193
  %3323 = vst.msk [vmem:[%s2 + $0x2f0] sm:$0xff] %vm3228, %v3194
  %3324 = vst.msk [vmem:[%s2 + $0x2f8] sm:$0xff] %vm3228, %v3195
  %3325 = vst.msk [vmem:[%s2 + $0x300] sm:$0xff] %vm3228, %v3196
  %3326 = vst.msk [vmem:[%s2 + $0x308] sm:$0xff] %vm3228, %v3197
  %3327 = vst.msk [vmem:[%s2 + $0x310] sm:$0xff] %vm3228, %v3198
  %3328 = vst.msk [vmem:[%s2 + $0x318] sm:$0xff] %vm3228, %v3199
  %3329 = vst.msk [vmem:[%s2 + $0x320] sm:$0xff] %vm3228, %v3200
  %3330 = vst.msk [vmem:[%s2 + $0x328] sm:$0xff] %vm3228, %v3201
  %3331 = vst.msk [vmem:[%s2 + $0x330] sm:$0xff] %vm3228, %v3202
  %3332 = vst.msk [vmem:[%s2 + $0x338] sm:$0xff] %vm3228, %v3203
  %3333 = vst.msk [vmem:[%s2 + $0x340] sm:$0xff] %vm3228, %v3204
  %3334 = vst.msk [vmem:[%s2 + $0x348] sm:$0xff] %vm3228, %v3205
  %3335 = vst.msk [vmem:[%s2 + $0x350] sm:$0xff] %vm3228, %v3206
  %3336 = vst.msk [vmem:[%s2 + $0x358] sm:$0xff] %vm3228, %v3207
  %3337 = vst.msk [vmem:[%s2 + $0x360] sm:$0xff] %vm3228, %v3208
  %3338 = vst.msk [vmem:[%s2 + $0x368] sm:$0xff] %vm3228, %v3209
  %3339 = vst.msk [vmem:[%s2 + $0x370] sm:$0xff] %vm3228, %v3210
  %3340 = vst.msk [vmem:[%s2 + $0x378] sm:$0xff] %vm3228, %v3211
  %3341 = vst.msk [vmem:[%s2 + $0x380] sm:$0xff] %vm3228, %v3212
  %3342 = vst.msk [vmem:[%s2 + $0x388] sm:$0xff] %vm3228, %v3213
  %3343 = vst.msk [vmem:[%s2 + $0x390] sm:$0xff] %vm3228, %v3214
  %3344 = vst.msk [vmem:[%s2 + $0x398] sm:$0xff] %vm3228, %v3215
  %3345 = vst.msk [vmem:[%s2 + $0x3a0] sm:$0xff] %vm3228, %v3216
  %3346 = vst.msk [vmem:[%s2 + $0x3a8] sm:$0xff] %vm3228, %v3217
  %3347 = vst.msk [vmem:[%s2 + $0x3b0] sm:$0xff] %vm3228, %v3218
  %3348 = vst.msk [vmem:[%s2 + $0x3b8] sm:$0xff] %vm3228, %v3219
  %3349 = vst.msk [vmem:[%s2 + $0x3c0] sm:$0xff] %vm3228, %v3220
  %3350 = vst.msk [vmem:[%s2 + $0x3c8] sm:$0xff] %vm3228, %v3221
  %3351 = vst.msk [vmem:[%s2 + $0x3d0] sm:$0xff] %vm3228, %v3222
  %3352 = vst.msk [vmem:[%s2 + $0x3d8] sm:$0xff] %vm3228, %v3223
  %3353 = vst.msk [vmem:[%s2 + $0x3e0] sm:$0xff] %vm3228, %v3224
  %3354 = vst.msk [vmem:[%s2 + $0x3e8] sm:$0xff] %vm3228, %v3225
  %3355 = vst.msk [vmem:[%s2 + $0x3f0] sm:$0xff] %vm3228, %v3226
  %3356 = vst.msk [vmem:[%s2 + $0x3f8] sm:$0xff] %vm3228, %v3227
  // Predicated region
  $region10: #{tpu_custom_call.1} parent=0 // pred_check
    _
  $region11: #{tpu_custom_call.1} parent=0 // pred_check_branch
    %3358 = sbr.rel (0) target = $region13
  $region12: #{tpu_custom_call.1} parent=0 // pred_region
    _
  $region13: #{tpu_custom_call.1} parent=0 // pred_fallthru
    _
  // Predicated region
  $region14: #{tpu_custom_call.1} parent=0 // pred_check
    _
  $region15: #{tpu_custom_call.1} parent=0 // pred_check_branch
    %3360 = sbr.rel (0) target = $region17
  $region16: #{tpu_custom_call.1} parent=0 // pred_region
    _
  $region17: #{tpu_custom_call.1} parent=0 // pred_fallthru
    _

</llo_original>
